<compile_context>
chip_gen: v6e
topology: v6e:2x2x1
jax: 0.10.0
libtpu: 0.0.40
codegen_flags: <defaults>
</compile_context>

<pallas_src>
import functools
import math

import jax
import jax.numpy as jnp
from jax import lax
from jax.experimental import pallas as pl
from jax.experimental.pallas import tpu as pltpu


def _layer_norm_f32(x, gamma, beta, eps):
    # Statistics always in f32 (v5e has no native bf16 VPU/EUP path).
    mean = jnp.mean(x, axis=-1, keepdims=True)
    var = jnp.mean(jnp.square(x - mean), axis=-1, keepdims=True)
    return (x - mean) * lax.rsqrt(var + eps) * gamma + beta


def bert_layer_kernel(
    hq_ref, hkv_ref,
    qw_ref, qb_ref, kw_ref, kb_ref, vw_ref, vb_ref,
    aow_ref, aob_ref, ln1g_ref, ln1b_ref,
    iw_ref, ib_ref, ow_ref, ob_ref, ln2g_ref, ln2b_ref,
    out_ref,
    k_cache, v_cache,
    *, num_heads, head_dim, ln_eps, ffn_chunk):
    f32 = jnp.float32
    bf16 = jnp.bfloat16
    nH, dh = num_heads, head_dim
    tS, H = hq_ref.shape[1], hq_ref.shape[2]

    # --- K/V projections: once per batch element (first query tile), cached
    #     across query tiles in head-major bf16 VMEM scratch. ---
    @pl.when(pl.program_id(1) == 0)
    def _compute_kv():
        xkv = hkv_ref[0]                                            # [S, H] bf16
        k = jnp.dot(xkv, kw_ref[...], preferred_element_type=f32) + kb_ref[0]
        v = jnp.dot(xkv, vw_ref[...], preferred_element_type=f32) + vb_ref[0]
        for h in range(nH):
            sl = slice(h * dh, (h + 1) * dh)
            k_cache[h] = k[:, sl].astype(bf16)                      # [S, dh]
            v_cache[h] = v[:, sl].astype(bf16)

    xq = hq_ref[0].astype(f32)                     # [tS, H] residual (f32)
    xq_b = xq.astype(bf16)

    # --- BertSelfAttention: query projection, 1/sqrt(dh) folded in once ---
    q = jnp.dot(xq_b, qw_ref[...], preferred_element_type=f32) + qb_ref[0]
    q = q * (1.0 / math.sqrt(dh))

    # Per-head attention.  Each head's context is folded directly into the
    # output projection (block-row of Wo), so no context scratch / masked
    # lane-offset stores are needed.
    attn = jnp.zeros((tS, H), f32) + aob_ref[0]
    for h in range(nH):
        sl = slice(h * dh, (h + 1) * dh)
        qh = q[:, sl].astype(bf16)                                  # [tS, dh]
        kh = k_cache[h]                                             # [S, dh]
        vh = v_cache[h]                                             # [S, dh]
        scores = lax.dot_general(qh, kh, (((1,), (1,)), ((), ())),
                                 preferred_element_type=f32)        # [tS, S]
        m = jnp.max(scores, axis=-1, keepdims=True)
        e = jnp.exp(scores - m)
        denom = jnp.sum(e, axis=-1, keepdims=True)
        probs = (e * pl.reciprocal(denom, approx=True)).astype(bf16)
        ctx_h = jnp.dot(probs, vh, preferred_element_type=f32)      # [tS, dh]
        attn = attn + jnp.dot(ctx_h.astype(bf16), aow_ref[sl, :],
                              preferred_element_type=f32)           # [tS, H]

    # --- BertSelfOutput: residual + LayerNorm (f32 stats) ---
    h1 = _layer_norm_f32(attn + xq, ln1g_ref[0], ln1b_ref[0], ln_eps)
    h1_b = h1.astype(bf16)

    # --- BertIntermediate + BertOutput: chunked over the intermediate dim so
    #     the live GELU intermediate is [tS, ffn_chunk], not [tS, I]. ---
    I = iw_ref.shape[1]
    inv_sqrt2 = 1.0 / math.sqrt(2.0)
    ff = jnp.zeros_like(h1) + ob_ref[0]            # fold output bias in once
    for c0 in range(0, I, ffn_chunk):
        inter = jnp.dot(h1_b, iw_ref[:, c0:c0 + ffn_chunk],
                        preferred_element_type=f32) + ib_ref[:, c0:c0 + ffn_chunk]
        inter = 0.5 * inter * (1.0 + lax.erf(inter * inv_sqrt2))    # exact gelu
        ff = ff + jnp.dot(inter.astype(bf16), ow_ref[c0:c0 + ffn_chunk, :],
                          preferred_element_type=f32)

    h2 = _layer_norm_f32(ff + h1, ln2g_ref[0], ln2b_ref[0], ln_eps)
    out_ref[0] = h2.astype(out_ref.dtype)


def _tpu_vmem_capacity_bytes():
    cap = 128 * 1024 * 1024
    try:
        cap = int(getattr(pltpu.get_tpu_info(), "vmem_capacity_bytes", cap))
    except Exception:
        pass
    return cap


def _pick_seq_tile(S, vmem_cap_bytes):
    # Smaller tiles on v7x (64 MiB VMEM), larger on v5e/v6e (128 MiB).
    max_tile = 256 if vmem_cap_bytes <= 64 * 1024 * 1024 else 512
    if S <= max_tile:
        return S
    for cand in (512, 384, 256, 128, 64, 32, 16, 8):
        if cand <= max_tile and S % cand == 0:
            return cand
    return S


def _pick_ffn_chunk(I):
    if I <= 512:
        return I
    for cand in (512, 384, 256, 128):
        if I % cand == 0:
            return cand
    return I


def _weight_spec(shape):
    """Grid-invariant block: single-buffered to halve weight VMEM."""
    index_map = lambda b, qi: (0,) * len(shape)
    if hasattr(pl, "Buffered"):
        try:
            return pl.BlockSpec(shape, index_map, pipeline_mode=pl.Buffered(1))
        except TypeError:
            pass
    return pl.BlockSpec(shape, index_map)


def bert_layer(hidden, params, *, num_heads, ln_eps=1e-12, seq_tile=None):
    """Fused BertLayer forward.  hidden: [B, S, H] (f32).

    NOTE: attention_mask / head_mask / cross-attention / past_key_value paths
    of BertLayer.forward are not supported (default-argument path only).
    """
    B, S, H = hidden.shape
    I = params["inter_w"].shape[1]
    assert H % num_heads == 0
    head_dim = H // num_heads

    vmem_cap = _tpu_vmem_capacity_bytes()
    vmem_limit = min(vmem_cap * 5 // 8, 96 * 1024 * 1024)

    tS = _pick_seq_tile(S, vmem_cap) if seq_tile is None else seq_tile
    assert S % tS == 0
    n_q = S // tS

    ffn_chunk = _pick_ffn_chunk(I)
    assert I % ffn_chunk == 0

    q_block = pl.BlockSpec((1, tS, H), lambda b, qi: (b, qi, 0))
    kv_block = pl.BlockSpec((1, S, H), lambda b, qi: (b, 0, 0))

    in_specs = [
        q_block, kv_block,
        _weight_spec((H, H)), _weight_spec((1, H)),
        _weight_spec((H, H)), _weight_spec((1, H)),
        _weight_spec((H, H)), _weight_spec((1, H)),
        _weight_spec((H, H)), _weight_spec((1, H)),
        _weight_spec((1, H)), _weight_spec((1, H)),
        _weight_spec((H, I)), _weight_spec((1, I)),
        _weight_spec((I, H)), _weight_spec((1, H)),
        _weight_spec((1, H)), _weight_spec((1, H)),
    ]

    kernel = functools.partial(bert_layer_kernel, num_heads=num_heads,
                               head_dim=head_dim, ln_eps=ln_eps,
                               ffn_chunk=ffn_chunk)

    return pl.pallas_call(
        kernel,
        out_shape=jax.ShapeDtypeStruct((B, S, H), hidden.dtype),
        grid_spec=pltpu.PrefetchScalarGridSpec(
            num_scalar_prefetch=0,
            grid=(B, n_q),
            in_specs=in_specs,
            out_specs=q_block,
            scratch_shapes=[
                pltpu.VMEM((num_heads, S, head_dim), jnp.bfloat16),  # K cache
                pltpu.VMEM((num_heads, S, head_dim), jnp.bfloat16),  # V cache
            ],
        ),
        compiler_params=pltpu.CompilerParams(
            # B is independent -> megacore split; the query-tile axis carries
            # the cached K/V state -> must be "arbitrary".
            dimension_semantics=("parallel", "arbitrary"),
            vmem_limit_bytes=vmem_limit),
    )(hidden, hidden.astype(jnp.bfloat16),
      params["q_w"], params["q_b"], params["k_w"], params["k_b"],
      params["v_w"], params["v_b"], params["ao_w"], params["ao_b"],
      params["ln1_g"], params["ln1_b"], params["inter_w"], params["inter_b"],
      params["out_w"], params["out_b"], params["ln2_g"], params["ln2_b"])


def bert_layer_ref(hidden, params, *, num_heads, ln_eps=1e-12):
    """Pure-JAX f32 reference of BertLayer.forward (default-arg path)."""
    x = hidden.astype(jnp.float32)
    B, S, H = x.shape
    dh = H // num_heads

    def lin(y, w, b):
        return y @ w.astype(jnp.float32) + b[0].astype(jnp.float32)

    def ln(y, g, b):
        mu = y.mean(-1, keepdims=True)
        var = ((y - mu) ** 2).mean(-1, keepdims=True)
        return (y - mu) * lax.rsqrt(var + ln_eps) * g[0] + b[0]

    q = lin(x, params["q_w"], params["q_b"])
    k = lin(x, params["k_w"], params["k_b"])
    v = lin(x, params["v_w"], params["v_b"])
    qh = q.reshape(B, S, num_heads, dh).transpose(0, 2, 1, 3)
    kh = k.reshape(B, S, num_heads, dh).transpose(0, 2, 1, 3)
    vh = v.reshape(B, S, num_heads, dh).transpose(0, 2, 1, 3)
    scores = jnp.einsum('bhqd,bhkd->bhqk', qh, kh) / math.sqrt(dh)
    probs = jax.nn.softmax(scores, axis=-1)
    ctx = jnp.einsum('bhqk,bhkd->bhqd', probs, vh)
    ctx = ctx.transpose(0, 2, 1, 3).reshape(B, S, H)
    attn = lin(ctx, params["ao_w"], params["ao_b"])
    h1 = ln(attn + x, params["ln1_g"], params["ln1_b"])
    inter = lin(h1, params["inter_w"], params["inter_b"])
    inter = 0.5 * inter * (1.0 + lax.erf(inter / jnp.sqrt(jnp.float32(2.0))))
    ff = lin(inter, params["out_w"], params["out_b"])
    return ln(ff + h1, params["ln2_g"], params["ln2_b"])


def init_layer_params(key, hidden_size, intermediate_size):
    """Weights as [in, out] (torch weight transposed); weights bf16, rest f32."""
    ks = jax.random.split(key, 6)
    std = 0.02
    H, I = hidden_size, intermediate_size
    bf16, f32 = jnp.bfloat16, jnp.float32
    return {
        "q_w": (jax.random.normal(ks[0], (H, H), f32) * std).astype(bf16),
        "q_b": jnp.zeros((1, H), f32),
        "k_w": (jax.random.normal(ks[1], (H, H), f32) * std).astype(bf16),
        "k_b": jnp.zeros((1, H), f32),
        "v_w": (jax.random.normal(ks[2], (H, H), f32) * std).astype(bf16),
        "v_b": jnp.zeros((1, H), f32),
        "ao_w": (jax.random.normal(ks[3], (H, H), f32) * std).astype(bf16),
        "ao_b": jnp.zeros((1, H), f32),
        "ln1_g": jnp.ones((1, H), f32),
        "ln1_b": jnp.zeros((1, H), f32),
        "inter_w": (jax.random.normal(ks[4], (H, I), f32) * std).astype(bf16),
        "inter_b": jnp.zeros((1, I), f32),
        "out_w": (jax.random.normal(ks[5], (I, H), f32) * std).astype(bf16),
        "out_b": jnp.zeros((1, H), f32),
        "ln2_g": jnp.ones((1, H), f32),
        "ln2_b": jnp.zeros((1, H), f32),
    }


if __name__ == "__main__":
    # Small config consistent with BertLayer.forward.
    B, S, H = 2, 16, 32
    num_heads = 4
    intermediate_size = 64

    key = jax.random.PRNGKey(0)
    k_hidden, k_params = jax.random.split(key)

    hidden_states = jax.random.normal(k_hidden, (B, S, H), jnp.float32)
    params = init_layer_params(k_params, H, intermediate_size)

    # seq_tile=8 forces two query tiles per batch element so the cached-K/V
    # reuse path (qi > 0) is exercised.
    out = bert_layer(hidden_states, params, num_heads=num_heads, seq_tile=8)
    out = jax.block_until_ready(out)

    assert out.shape == (B, S, H) and out.dtype == jnp.float32
    assert jnp.all(jnp.isfinite(out))

    ref = bert_layer_ref(hidden_states, params, num_heads=num_heads)
    assert jnp.allclose(out, ref, atol=5e-2, rtol=5e-2), (
        float(jnp.max(jnp.abs(out - ref))))

    print("KERNEL_OK")
</pallas_src>

<mosaic_0001>
module attributes {stable_mosaic.version = 11 : i64} {
  func.func @bert_layer_kernel(%arg0: i32, %arg1: i32, %arg2: memref<1x8x32xf32, #tpu.memory_space<vmem>>, %arg3: memref<1x16x32xbf16, #tpu.memory_space<vmem>>, %arg4: memref<32x32xbf16, #tpu.memory_space<vmem>>, %arg5: memref<1x32xf32, #tpu.memory_space<vmem>>, %arg6: memref<32x32xbf16, #tpu.memory_space<vmem>>, %arg7: memref<1x32xf32, #tpu.memory_space<vmem>>, %arg8: memref<32x32xbf16, #tpu.memory_space<vmem>>, %arg9: memref<1x32xf32, #tpu.memory_space<vmem>>, %arg10: memref<32x32xbf16, #tpu.memory_space<vmem>>, %arg11: memref<1x32xf32, #tpu.memory_space<vmem>>, %arg12: memref<1x32xf32, #tpu.memory_space<vmem>>, %arg13: memref<1x32xf32, #tpu.memory_space<vmem>>, %arg14: memref<32x64xbf16, #tpu.memory_space<vmem>>, %arg15: memref<1x64xf32, #tpu.memory_space<vmem>>, %arg16: memref<64x32xbf16, #tpu.memory_space<vmem>>, %arg17: memref<1x32xf32, #tpu.memory_space<vmem>>, %arg18: memref<1x32xf32, #tpu.memory_space<vmem>>, %arg19: memref<1x32xf32, #tpu.memory_space<vmem>>, %arg20: memref<1x8x32xf32, #tpu.memory_space<vmem>>, %arg21: memref<4x16x8xbf16, #tpu.memory_space<vmem>>, %arg22: memref<4x16x8xbf16, #tpu.memory_space<vmem>>) attributes {dimension_semantics = [#tpu.dimension_semantics<parallel>, #tpu.dimension_semantics<arbitrary>], iteration_bounds = array<i64: 2, 2>, scalar_prefetch = 0 : i64, scratch_operands = 2 : i64, tpu.core_type = #tpu.core_type<tc>, window_params = [{transform_indices = @transform_0, window_bounds = array<i64: 1, 8, 32>}, {transform_indices = @transform_1, window_bounds = array<i64: 1, 16, 32>}, {pipeline_mode = #tpu.pipeline_mode<synchronous>, transform_indices = @transform_2, window_bounds = array<i64: 32, 32>}, {pipeline_mode = #tpu.pipeline_mode<synchronous>, transform_indices = @transform_3, window_bounds = array<i64: 1, 32>}, {pipeline_mode = #tpu.pipeline_mode<synchronous>, transform_indices = @transform_4, window_bounds = array<i64: 32, 32>}, {pipeline_mode = #tpu.pipeline_mode<synchronous>, transform_indices = @transform_5, window_bounds = array<i64: 1, 32>}, {pipeline_mode = #tpu.pipeline_mode<synchronous>, transform_indices = @transform_6, window_bounds = array<i64: 32, 32>}, {pipeline_mode = #tpu.pipeline_mode<synchronous>, transform_indices = @transform_7, window_bounds = array<i64: 1, 32>}, {pipeline_mode = #tpu.pipeline_mode<synchronous>, transform_indices = @transform_8, window_bounds = array<i64: 32, 32>}, {pipeline_mode = #tpu.pipeline_mode<synchronous>, transform_indices = @transform_9, window_bounds = array<i64: 1, 32>}, {pipeline_mode = #tpu.pipeline_mode<synchronous>, transform_indices = @transform_10, window_bounds = array<i64: 1, 32>}, {pipeline_mode = #tpu.pipeline_mode<synchronous>, transform_indices = @transform_11, window_bounds = array<i64: 1, 32>}, {pipeline_mode = #tpu.pipeline_mode<synchronous>, transform_indices = @transform_12, window_bounds = array<i64: 32, 64>}, {pipeline_mode = #tpu.pipeline_mode<synchronous>, transform_indices = @transform_13, window_bounds = array<i64: 1, 64>}, {pipeline_mode = #tpu.pipeline_mode<synchronous>, transform_indices = @transform_14, window_bounds = array<i64: 64, 32>}, {pipeline_mode = #tpu.pipeline_mode<synchronous>, transform_indices = @transform_15, window_bounds = array<i64: 1, 32>}, {pipeline_mode = #tpu.pipeline_mode<synchronous>, transform_indices = @transform_16, window_bounds = array<i64: 1, 32>}, {pipeline_mode = #tpu.pipeline_mode<synchronous>, transform_indices = @transform_17, window_bounds = array<i64: 1, 32>}, {transform_indices = @transform_18, window_bounds = array<i64: 1, 8, 32>}]} {
    %c0_i32 = arith.constant 0 : i32
    %0 = arith.cmpi eq, %arg1, %c0_i32 : i32
    %1 = arith.extui %0 : i1 to i32
    %c0_i32_0 = arith.constant 0 : i32
    %2 = arith.cmpi ne, %1, %c0_i32_0 : i32
    scf.if %2 {
      %c0_92 = arith.constant 0 : index
      %c0_93 = arith.constant 0 : index
      %c0_94 = arith.constant 0 : index
      %198 = vector.load %arg3[%c0_92, %c0_93, %c0_94] : memref<1x16x32xbf16, #tpu.memory_space<vmem>>, vector<1x16x32xbf16>
      %199 = vector.shape_cast %198 : vector<1x16x32xbf16> to vector<16x32xbf16>
      %c0_95 = arith.constant 0 : index
      %c0_96 = arith.constant 0 : index
      %200 = vector.load %arg6[%c0_95, %c0_96] : memref<32x32xbf16, #tpu.memory_space<vmem>>, vector<32x32xbf16>
      %cst_97 = arith.constant dense<0.000000e+00> : vector<16x32xf32>
      %201 = tpu.matmul %199, %200, %cst_97 {dimension_numbers = #tpu.dot_dimension_numbers<[1], [0], [0], [1], [0, 0, 1, 1], [], []>} : vector<16x32xbf16>, vector<32x32xbf16>, vector<16x32xf32> -> vector<16x32xf32>
      %c0_98 = arith.constant 0 : index
      %c0_99 = arith.constant 0 : index
      %202 = vector.load %arg7[%c0_98, %c0_99] : memref<1x32xf32, #tpu.memory_space<vmem>>, vector<1x32xf32>
      %203 = vector.shape_cast %202 : vector<1x32xf32> to vector<32xf32>
      %204 = vector.shape_cast %203 : vector<32xf32> to vector<1x32xf32>
      %205 = vector.broadcast %204 : vector<1x32xf32> to vector<16x32xf32>
      %206 = arith.addf %201, %205 : vector<16x32xf32>
      %c0_100 = arith.constant 0 : index
      %c0_101 = arith.constant 0 : index
      %207 = vector.load %arg8[%c0_100, %c0_101] : memref<32x32xbf16, #tpu.memory_space<vmem>>, vector<32x32xbf16>
      %cst_102 = arith.constant dense<0.000000e+00> : vector<16x32xf32>
      %208 = tpu.matmul %199, %207, %cst_102 {dimension_numbers = #tpu.dot_dimension_numbers<[1], [0], [0], [1], [0, 0, 1, 1], [], []>} : vector<16x32xbf16>, vector<32x32xbf16>, vector<16x32xf32> -> vector<16x32xf32>
      %c0_103 = arith.constant 0 : index
      %c0_104 = arith.constant 0 : index
      %209 = vector.load %arg9[%c0_103, %c0_104] : memref<1x32xf32, #tpu.memory_space<vmem>>, vector<1x32xf32>
      %210 = vector.shape_cast %209 : vector<1x32xf32> to vector<32xf32>
      %211 = vector.shape_cast %210 : vector<32xf32> to vector<1x32xf32>
      %212 = vector.broadcast %211 : vector<1x32xf32> to vector<16x32xf32>
      %213 = arith.addf %208, %212 : vector<16x32xf32>
      %214 = vector.extract_strided_slice %206 {offsets = [0, 0], sizes = [16, 8], strides = [1, 1]} : vector<16x32xf32> to vector<16x8xf32>
      %215 = arith.truncf %214 : vector<16x8xf32> to vector<16x8xbf16>
      %c0_105 = arith.constant 0 : index
      %c0_106 = arith.constant 0 : index
      %c0_107 = arith.constant 0 : index
      %216 = vector.load %arg21[%c0_105, %c0_106, %c0_107] : memref<4x16x8xbf16, #tpu.memory_space<vmem>>, vector<1x16x8xbf16>
      %217 = vector.shape_cast %216 : vector<1x16x8xbf16> to vector<16x8xbf16>
      %218 = vector.shape_cast %215 : vector<16x8xbf16> to vector<1x16x8xbf16>
      tpu.vector_store %arg21[%c0_105, %c0_106, %c0_107], %218 {strides = array<i32>} : memref<4x16x8xbf16, #tpu.memory_space<vmem>>, vector<1x16x8xbf16>,
      %219 = vector.extract_strided_slice %213 {offsets = [0, 0], sizes = [16, 8], strides = [1, 1]} : vector<16x32xf32> to vector<16x8xf32>
      %220 = arith.truncf %219 : vector<16x8xf32> to vector<16x8xbf16>
      %c0_108 = arith.constant 0 : index
      %c0_109 = arith.constant 0 : index
      %c0_110 = arith.constant 0 : index
      %221 = vector.load %arg22[%c0_108, %c0_109, %c0_110] : memref<4x16x8xbf16, #tpu.memory_space<vmem>>, vector<1x16x8xbf16>
      %222 = vector.shape_cast %221 : vector<1x16x8xbf16> to vector<16x8xbf16>
      %223 = vector.shape_cast %220 : vector<16x8xbf16> to vector<1x16x8xbf16>
      tpu.vector_store %arg22[%c0_108, %c0_109, %c0_110], %223 {strides = array<i32>} : memref<4x16x8xbf16, #tpu.memory_space<vmem>>, vector<1x16x8xbf16>,
      %224 = vector.extract_strided_slice %206 {offsets = [0, 8], sizes = [16, 8], strides = [1, 1]} : vector<16x32xf32> to vector<16x8xf32>
      %225 = arith.truncf %224 : vector<16x8xf32> to vector<16x8xbf16>
      %c1_111 = arith.constant 1 : index
      %c0_112 = arith.constant 0 : index
      %c0_113 = arith.constant 0 : index
      %226 = vector.load %arg21[%c1_111, %c0_112, %c0_113] : memref<4x16x8xbf16, #tpu.memory_space<vmem>>, vector<1x16x8xbf16>
      %227 = vector.shape_cast %226 : vector<1x16x8xbf16> to vector<16x8xbf16>
      %228 = vector.shape_cast %225 : vector<16x8xbf16> to vector<1x16x8xbf16>
      tpu.vector_store %arg21[%c1_111, %c0_112, %c0_113], %228 {strides = array<i32>} : memref<4x16x8xbf16, #tpu.memory_space<vmem>>, vector<1x16x8xbf16>,
      %229 = vector.extract_strided_slice %213 {offsets = [0, 8], sizes = [16, 8], strides = [1, 1]} : vector<16x32xf32> to vector<16x8xf32>
      %230 = arith.truncf %229 : vector<16x8xf32> to vector<16x8xbf16>
      %c1_114 = arith.constant 1 : index
      %c0_115 = arith.constant 0 : index
      %c0_116 = arith.constant 0 : index
      %231 = vector.load %arg22[%c1_114, %c0_115, %c0_116] : memref<4x16x8xbf16, #tpu.memory_space<vmem>>, vector<1x16x8xbf16>
      %232 = vector.shape_cast %231 : vector<1x16x8xbf16> to vector<16x8xbf16>
      %233 = vector.shape_cast %230 : vector<16x8xbf16> to vector<1x16x8xbf16>
      tpu.vector_store %arg22[%c1_114, %c0_115, %c0_116], %233 {strides = array<i32>} : memref<4x16x8xbf16, #tpu.memory_space<vmem>>, vector<1x16x8xbf16>,
      %234 = vector.extract_strided_slice %206 {offsets = [0, 16], sizes = [16, 8], strides = [1, 1]} : vector<16x32xf32> to vector<16x8xf32>
      %235 = arith.truncf %234 : vector<16x8xf32> to vector<16x8xbf16>
      %c2_117 = arith.constant 2 : index
      %c0_118 = arith.constant 0 : index
      %c0_119 = arith.constant 0 : index
      %236 = vector.load %arg21[%c2_117, %c0_118, %c0_119] : memref<4x16x8xbf16, #tpu.memory_space<vmem>>, vector<1x16x8xbf16>
      %237 = vector.shape_cast %236 : vector<1x16x8xbf16> to vector<16x8xbf16>
      %238 = vector.shape_cast %235 : vector<16x8xbf16> to vector<1x16x8xbf16>
      tpu.vector_store %arg21[%c2_117, %c0_118, %c0_119], %238 {strides = array<i32>} : memref<4x16x8xbf16, #tpu.memory_space<vmem>>, vector<1x16x8xbf16>,
      %239 = vector.extract_strided_slice %213 {offsets = [0, 16], sizes = [16, 8], strides = [1, 1]} : vector<16x32xf32> to vector<16x8xf32>
      %240 = arith.truncf %239 : vector<16x8xf32> to vector<16x8xbf16>
      %c2_120 = arith.constant 2 : index
      %c0_121 = arith.constant 0 : index
      %c0_122 = arith.constant 0 : index
      %241 = vector.load %arg22[%c2_120, %c0_121, %c0_122] : memref<4x16x8xbf16, #tpu.memory_space<vmem>>, vector<1x16x8xbf16>
      %242 = vector.shape_cast %241 : vector<1x16x8xbf16> to vector<16x8xbf16>
      %243 = vector.shape_cast %240 : vector<16x8xbf16> to vector<1x16x8xbf16>
      tpu.vector_store %arg22[%c2_120, %c0_121, %c0_122], %243 {strides = array<i32>} : memref<4x16x8xbf16, #tpu.memory_space<vmem>>, vector<1x16x8xbf16>,
      %244 = vector.extract_strided_slice %206 {offsets = [0, 24], sizes = [16, 8], strides = [1, 1]} : vector<16x32xf32> to vector<16x8xf32>
      %245 = arith.truncf %244 : vector<16x8xf32> to vector<16x8xbf16>
      %c3_123 = arith.constant 3 : index
      %c0_124 = arith.constant 0 : index
      %c0_125 = arith.constant 0 : index
      %246 = vector.load %arg21[%c3_123, %c0_124, %c0_125] : memref<4x16x8xbf16, #tpu.memory_space<vmem>>, vector<1x16x8xbf16>
      %247 = vector.shape_cast %246 : vector<1x16x8xbf16> to vector<16x8xbf16>
      %248 = vector.shape_cast %245 : vector<16x8xbf16> to vector<1x16x8xbf16>
      tpu.vector_store %arg21[%c3_123, %c0_124, %c0_125], %248 {strides = array<i32>} : memref<4x16x8xbf16, #tpu.memory_space<vmem>>, vector<1x16x8xbf16>,
      %249 = vector.extract_strided_slice %213 {offsets = [0, 24], sizes = [16, 8], strides = [1, 1]} : vector<16x32xf32> to vector<16x8xf32>
      %250 = arith.truncf %249 : vector<16x8xf32> to vector<16x8xbf16>
      %c3_126 = arith.constant 3 : index
      %c0_127 = arith.constant 0 : index
      %c0_128 = arith.constant 0 : index
      %251 = vector.load %arg22[%c3_126, %c0_127, %c0_128] : memref<4x16x8xbf16, #tpu.memory_space<vmem>>, vector<1x16x8xbf16>
      %252 = vector.shape_cast %251 : vector<1x16x8xbf16> to vector<16x8xbf16>
      %253 = vector.shape_cast %250 : vector<16x8xbf16> to vector<1x16x8xbf16>
      tpu.vector_store %arg22[%c3_126, %c0_127, %c0_128], %253 {strides = array<i32>} : memref<4x16x8xbf16, #tpu.memory_space<vmem>>, vector<1x16x8xbf16>,
    } else {
    }
    %c0 = arith.constant 0 : index
    %c0_1 = arith.constant 0 : index
    %c0_2 = arith.constant 0 : index
    %3 = vector.load %arg2[%c0, %c0_1, %c0_2] : memref<1x8x32xf32, #tpu.memory_space<vmem>>, vector<1x8x32xf32>
    %4 = vector.shape_cast %3 : vector<1x8x32xf32> to vector<8x32xf32>
    %5 = arith.truncf %4 : vector<8x32xf32> to vector<8x32xbf16>
    %c0_3 = arith.constant 0 : index
    %c0_4 = arith.constant 0 : index
    %6 = vector.load %arg4[%c0_3, %c0_4] : memref<32x32xbf16, #tpu.memory_space<vmem>>, vector<32x32xbf16>
    %cst = arith.constant dense<0.000000e+00> : vector<8x32xf32>
    %7 = tpu.matmul %5, %6, %cst {dimension_numbers = #tpu.dot_dimension_numbers<[1], [0], [0], [1], [0, 0, 1, 1], [], []>} : vector<8x32xbf16>, vector<32x32xbf16>, vector<8x32xf32> -> vector<8x32xf32>
    %c0_5 = arith.constant 0 : index
    %c0_6 = arith.constant 0 : index
    %8 = vector.load %arg5[%c0_5, %c0_6] : memref<1x32xf32, #tpu.memory_space<vmem>>, vector<1x32xf32>
    %9 = vector.shape_cast %8 : vector<1x32xf32> to vector<32xf32>
    %10 = vector.shape_cast %9 : vector<32xf32> to vector<1x32xf32>
    %11 = vector.broadcast %10 : vector<1x32xf32> to vector<8x32xf32>
    %12 = arith.addf %7, %11 : vector<8x32xf32>
    %cst_7 = arith.constant 0.353553385 : f32
    %13 = vector.broadcast %cst_7 : f32 to vector<8x32xf32>
    %14 = arith.mulf %12, %13 : vector<8x32xf32>
    %cst_8 = arith.constant 0.000000e+00 : f32
    %15 = vector.broadcast %cst_8 : f32 to vector<8x32xf32>
    %c0_9 = arith.constant 0 : index
    %c0_10 = arith.constant 0 : index
    %16 = vector.load %arg11[%c0_9, %c0_10] : memref<1x32xf32, #tpu.memory_space<vmem>>, vector<1x32xf32>
    %17 = vector.shape_cast %16 : vector<1x32xf32> to vector<32xf32>
    %18 = vector.shape_cast %17 : vector<32xf32> to vector<1x32xf32>
    %19 = vector.broadcast %18 : vector<1x32xf32> to vector<8x32xf32>
    %20 = arith.addf %15, %19 : vector<8x32xf32>
    %21 = vector.extract_strided_slice %14 {offsets = [0, 0], sizes = [8, 8], strides = [1, 1]} : vector<8x32xf32> to vector<8x8xf32>
    %22 = arith.truncf %21 : vector<8x8xf32> to vector<8x8xbf16>
    %c0_11 = arith.constant 0 : index
    %c0_12 = arith.constant 0 : index
    %c0_13 = arith.constant 0 : index
    %23 = vector.load %arg21[%c0_11, %c0_12, %c0_13] : memref<4x16x8xbf16, #tpu.memory_space<vmem>>, vector<1x16x8xbf16>
    %24 = vector.shape_cast %23 : vector<1x16x8xbf16> to vector<16x8xbf16>
    %c0_14 = arith.constant 0 : index
    %c0_15 = arith.constant 0 : index
    %c0_16 = arith.constant 0 : index
    %25 = vector.load %arg22[%c0_14, %c0_15, %c0_16] : memref<4x16x8xbf16, #tpu.memory_space<vmem>>, vector<1x16x8xbf16>
    %26 = vector.shape_cast %25 : vector<1x16x8xbf16> to vector<16x8xbf16>
    %cst_17 = arith.constant dense<0.000000e+00> : vector<8x16xf32>
    %27 = tpu.matmul %22, %24, %cst_17 {dimension_numbers = #tpu.dot_dimension_numbers<[1], [1], [0], [0], [0, 0, 1, 0], [], []>} : vector<8x8xbf16>, vector<16x8xbf16>, vector<8x16xf32> -> vector<8x16xf32>
    %cst_18 = arith.constant dense<0xFF800000> : vector<8xf32>
    %28 = vector.multi_reduction <maximumf>, %27, %cst_18 [1] : vector<8x16xf32> to vector<8xf32>
    %29 = vector.shape_cast %28 : vector<8xf32> to vector<8x1xf32>
    %30 = vector.broadcast %29 : vector<8x1xf32> to vector<8x16xf32>
    %31 = arith.subf %27, %30 : vector<8x16xf32>
    %32 = math.exp %31 : vector<8x16xf32>
    %cst_19 = arith.constant dense<0.000000e+00> : vector<8xf32>
    %33 = vector.multi_reduction <add>, %32, %cst_19 [1] : vector<8x16xf32> to vector<8xf32>
    %34 = vector.shape_cast %33 : vector<8xf32> to vector<8x1xf32>
    %35 = tpu.reciprocal %34 {approx = true} : vector<8x1xf32> -> vector<8x1xf32>
    %36 = vector.broadcast %35 : vector<8x1xf32> to vector<8x16xf32>
    %37 = arith.mulf %32, %36 : vector<8x16xf32>
    %38 = arith.truncf %37 : vector<8x16xf32> to vector<8x16xbf16>
    %cst_20 = arith.constant dense<0.000000e+00> : vector<8x8xf32>
    %39 = tpu.matmul %38, %26, %cst_20 {dimension_numbers = #tpu.dot_dimension_numbers<[1], [0], [0], [1], [0, 0, 1, 1], [], []>} : vector<8x16xbf16>, vector<16x8xbf16>, vector<8x8xf32> -> vector<8x8xf32>
    %40 = arith.truncf %39 : vector<8x8xf32> to vector<8x8xbf16>
    %c0_21 = arith.constant 0 : index
    %c0_22 = arith.constant 0 : index
    %41 = vector.load %arg10[%c0_21, %c0_22] : memref<32x32xbf16, #tpu.memory_space<vmem>>, vector<8x32xbf16>
    %cst_23 = arith.constant dense<0.000000e+00> : vector<8x32xf32>
    %42 = tpu.matmul %40, %41, %cst_23 {dimension_numbers = #tpu.dot_dimension_numbers<[1], [0], [0], [1], [0, 0, 1, 1], [], []>} : vector<8x8xbf16>, vector<8x32xbf16>, vector<8x32xf32> -> vector<8x32xf32>
    %43 = arith.addf %20, %42 : vector<8x32xf32>
    %44 = vector.extract_strided_slice %14 {offsets = [0, 8], sizes = [8, 8], strides = [1, 1]} : vector<8x32xf32> to vector<8x8xf32>
    %45 = arith.truncf %44 : vector<8x8xf32> to vector<8x8xbf16>
    %c1 = arith.constant 1 : index
    %c0_24 = arith.constant 0 : index
    %c0_25 = arith.constant 0 : index
    %46 = vector.load %arg21[%c1, %c0_24, %c0_25] : memref<4x16x8xbf16, #tpu.memory_space<vmem>>, vector<1x16x8xbf16>
    %47 = vector.shape_cast %46 : vector<1x16x8xbf16> to vector<16x8xbf16>
    %c1_26 = arith.constant 1 : index
    %c0_27 = arith.constant 0 : index
    %c0_28 = arith.constant 0 : index
    %48 = vector.load %arg22[%c1_26, %c0_27, %c0_28] : memref<4x16x8xbf16, #tpu.memory_space<vmem>>, vector<1x16x8xbf16>
    %49 = vector.shape_cast %48 : vector<1x16x8xbf16> to vector<16x8xbf16>
    %cst_29 = arith.constant dense<0.000000e+00> : vector<8x16xf32>
    %50 = tpu.matmul %45, %47, %cst_29 {dimension_numbers = #tpu.dot_dimension_numbers<[1], [1], [0], [0], [0, 0, 1, 0], [], []>} : vector<8x8xbf16>, vector<16x8xbf16>, vector<8x16xf32> -> vector<8x16xf32>
    %cst_30 = arith.constant dense<0xFF800000> : vector<8xf32>
    %51 = vector.multi_reduction <maximumf>, %50, %cst_30 [1] : vector<8x16xf32> to vector<8xf32>
    %52 = vector.shape_cast %51 : vector<8xf32> to vector<8x1xf32>
    %53 = vector.broadcast %52 : vector<8x1xf32> to vector<8x16xf32>
    %54 = arith.subf %50, %53 : vector<8x16xf32>
    %55 = math.exp %54 : vector<8x16xf32>
    %cst_31 = arith.constant dense<0.000000e+00> : vector<8xf32>
    %56 = vector.multi_reduction <add>, %55, %cst_31 [1] : vector<8x16xf32> to vector<8xf32>
    %57 = vector.shape_cast %56 : vector<8xf32> to vector<8x1xf32>
    %58 = tpu.reciprocal %57 {approx = true} : vector<8x1xf32> -> vector<8x1xf32>
    %59 = vector.broadcast %58 : vector<8x1xf32> to vector<8x16xf32>
    %60 = arith.mulf %55, %59 : vector<8x16xf32>
    %61 = arith.truncf %60 : vector<8x16xf32> to vector<8x16xbf16>
    %cst_32 = arith.constant dense<0.000000e+00> : vector<8x8xf32>
    %62 = tpu.matmul %61, %49, %cst_32 {dimension_numbers = #tpu.dot_dimension_numbers<[1], [0], [0], [1], [0, 0, 1, 1], [], []>} : vector<8x16xbf16>, vector<16x8xbf16>, vector<8x8xf32> -> vector<8x8xf32>
    %63 = arith.truncf %62 : vector<8x8xf32> to vector<8x8xbf16>
    %c8 = arith.constant 8 : index
    %c0_33 = arith.constant 0 : index
    %64 = vector.load %arg10[%c8, %c0_33] : memref<32x32xbf16, #tpu.memory_space<vmem>>, vector<8x32xbf16>
    %cst_34 = arith.constant dense<0.000000e+00> : vector<8x32xf32>
    %65 = tpu.matmul %63, %64, %cst_34 {dimension_numbers = #tpu.dot_dimension_numbers<[1], [0], [0], [1], [0, 0, 1, 1], [], []>} : vector<8x8xbf16>, vector<8x32xbf16>, vector<8x32xf32> -> vector<8x32xf32>
    %66 = arith.addf %43, %65 : vector<8x32xf32>
    %67 = vector.extract_strided_slice %14 {offsets = [0, 16], sizes = [8, 8], strides = [1, 1]} : vector<8x32xf32> to vector<8x8xf32>
    %68 = arith.truncf %67 : vector<8x8xf32> to vector<8x8xbf16>
    %c2 = arith.constant 2 : index
    %c0_35 = arith.constant 0 : index
    %c0_36 = arith.constant 0 : index
    %69 = vector.load %arg21[%c2, %c0_35, %c0_36] : memref<4x16x8xbf16, #tpu.memory_space<vmem>>, vector<1x16x8xbf16>
    %70 = vector.shape_cast %69 : vector<1x16x8xbf16> to vector<16x8xbf16>
    %c2_37 = arith.constant 2 : index
    %c0_38 = arith.constant 0 : index
    %c0_39 = arith.constant 0 : index
    %71 = vector.load %arg22[%c2_37, %c0_38, %c0_39] : memref<4x16x8xbf16, #tpu.memory_space<vmem>>, vector<1x16x8xbf16>
    %72 = vector.shape_cast %71 : vector<1x16x8xbf16> to vector<16x8xbf16>
    %cst_40 = arith.constant dense<0.000000e+00> : vector<8x16xf32>
    %73 = tpu.matmul %68, %70, %cst_40 {dimension_numbers = #tpu.dot_dimension_numbers<[1], [1], [0], [0], [0, 0, 1, 0], [], []>} : vector<8x8xbf16>, vector<16x8xbf16>, vector<8x16xf32> -> vector<8x16xf32>
    %cst_41 = arith.constant dense<0xFF800000> : vector<8xf32>
    %74 = vector.multi_reduction <maximumf>, %73, %cst_41 [1] : vector<8x16xf32> to vector<8xf32>
    %75 = vector.shape_cast %74 : vector<8xf32> to vector<8x1xf32>
    %76 = vector.broadcast %75 : vector<8x1xf32> to vector<8x16xf32>
    %77 = arith.subf %73, %76 : vector<8x16xf32>
    %78 = math.exp %77 : vector<8x16xf32>
    %cst_42 = arith.constant dense<0.000000e+00> : vector<8xf32>
    %79 = vector.multi_reduction <add>, %78, %cst_42 [1] : vector<8x16xf32> to vector<8xf32>
    %80 = vector.shape_cast %79 : vector<8xf32> to vector<8x1xf32>
    %81 = tpu.reciprocal %80 {approx = true} : vector<8x1xf32> -> vector<8x1xf32>
    %82 = vector.broadcast %81 : vector<8x1xf32> to vector<8x16xf32>
    %83 = arith.mulf %78, %82 : vector<8x16xf32>
    %84 = arith.truncf %83 : vector<8x16xf32> to vector<8x16xbf16>
    %cst_43 = arith.constant dense<0.000000e+00> : vector<8x8xf32>
    %85 = tpu.matmul %84, %72, %cst_43 {dimension_numbers = #tpu.dot_dimension_numbers<[1], [0], [0], [1], [0, 0, 1, 1], [], []>} : vector<8x16xbf16>, vector<16x8xbf16>, vector<8x8xf32> -> vector<8x8xf32>
    %86 = arith.truncf %85 : vector<8x8xf32> to vector<8x8xbf16>
    %c16 = arith.constant 16 : index
    %c0_44 = arith.constant 0 : index
    %87 = vector.load %arg10[%c16, %c0_44] : memref<32x32xbf16, #tpu.memory_space<vmem>>, vector<8x32xbf16>
    %cst_45 = arith.constant dense<0.000000e+00> : vector<8x32xf32>
    %88 = tpu.matmul %86, %87, %cst_45 {dimension_numbers = #tpu.dot_dimension_numbers<[1], [0], [0], [1], [0, 0, 1, 1], [], []>} : vector<8x8xbf16>, vector<8x32xbf16>, vector<8x32xf32> -> vector<8x32xf32>
    %89 = arith.addf %66, %88 : vector<8x32xf32>
    %90 = vector.extract_strided_slice %14 {offsets = [0, 24], sizes = [8, 8], strides = [1, 1]} : vector<8x32xf32> to vector<8x8xf32>
    %91 = arith.truncf %90 : vector<8x8xf32> to vector<8x8xbf16>
    %c3 = arith.constant 3 : index
    %c0_46 = arith.constant 0 : index
    %c0_47 = arith.constant 0 : index
    %92 = vector.load %arg21[%c3, %c0_46, %c0_47] : memref<4x16x8xbf16, #tpu.memory_space<vmem>>, vector<1x16x8xbf16>
    %93 = vector.shape_cast %92 : vector<1x16x8xbf16> to vector<16x8xbf16>
    %c3_48 = arith.constant 3 : index
    %c0_49 = arith.constant 0 : index
    %c0_50 = arith.constant 0 : index
    %94 = vector.load %arg22[%c3_48, %c0_49, %c0_50] : memref<4x16x8xbf16, #tpu.memory_space<vmem>>, vector<1x16x8xbf16>
    %95 = vector.shape_cast %94 : vector<1x16x8xbf16> to vector<16x8xbf16>
    %cst_51 = arith.constant dense<0.000000e+00> : vector<8x16xf32>
    %96 = tpu.matmul %91, %93, %cst_51 {dimension_numbers = #tpu.dot_dimension_numbers<[1], [1], [0], [0], [0, 0, 1, 0], [], []>} : vector<8x8xbf16>, vector<16x8xbf16>, vector<8x16xf32> -> vector<8x16xf32>
    %cst_52 = arith.constant dense<0xFF800000> : vector<8xf32>
    %97 = vector.multi_reduction <maximumf>, %96, %cst_52 [1] : vector<8x16xf32> to vector<8xf32>
    %98 = vector.shape_cast %97 : vector<8xf32> to vector<8x1xf32>
    %99 = vector.broadcast %98 : vector<8x1xf32> to vector<8x16xf32>
    %100 = arith.subf %96, %99 : vector<8x16xf32>
    %101 = math.exp %100 : vector<8x16xf32>
    %cst_53 = arith.constant dense<0.000000e+00> : vector<8xf32>
    %102 = vector.multi_reduction <add>, %101, %cst_53 [1] : vector<8x16xf32> to vector<8xf32>
    %103 = vector.shape_cast %102 : vector<8xf32> to vector<8x1xf32>
    %104 = tpu.reciprocal %103 {approx = true} : vector<8x1xf32> -> vector<8x1xf32>
    %105 = vector.broadcast %104 : vector<8x1xf32> to vector<8x16xf32>
    %106 = arith.mulf %101, %105 : vector<8x16xf32>
    %107 = arith.truncf %106 : vector<8x16xf32> to vector<8x16xbf16>
    %cst_54 = arith.constant dense<0.000000e+00> : vector<8x8xf32>
    %108 = tpu.matmul %107, %95, %cst_54 {dimension_numbers = #tpu.dot_dimension_numbers<[1], [0], [0], [1], [0, 0, 1, 1], [], []>} : vector<8x16xbf16>, vector<16x8xbf16>, vector<8x8xf32> -> vector<8x8xf32>
    %109 = arith.truncf %108 : vector<8x8xf32> to vector<8x8xbf16>
    %c24 = arith.constant 24 : index
    %c0_55 = arith.constant 0 : index
    %110 = vector.load %arg10[%c24, %c0_55] : memref<32x32xbf16, #tpu.memory_space<vmem>>, vector<8x32xbf16>
    %cst_56 = arith.constant dense<0.000000e+00> : vector<8x32xf32>
    %111 = tpu.matmul %109, %110, %cst_56 {dimension_numbers = #tpu.dot_dimension_numbers<[1], [0], [0], [1], [0, 0, 1, 1], [], []>} : vector<8x8xbf16>, vector<8x32xbf16>, vector<8x32xf32> -> vector<8x32xf32>
    %112 = arith.addf %89, %111 : vector<8x32xf32>
    %113 = arith.addf %112, %4 : vector<8x32xf32>
    %c0_57 = arith.constant 0 : index
    %c0_58 = arith.constant 0 : index
    %114 = vector.load %arg12[%c0_57, %c0_58] : memref<1x32xf32, #tpu.memory_space<vmem>>, vector<1x32xf32>
    %115 = vector.shape_cast %114 : vector<1x32xf32> to vector<32xf32>
    %c0_59 = arith.constant 0 : index
    %c0_60 = arith.constant 0 : index
    %116 = vector.load %arg13[%c0_59, %c0_60] : memref<1x32xf32, #tpu.memory_space<vmem>>, vector<1x32xf32>
    %117 = vector.shape_cast %116 : vector<1x32xf32> to vector<32xf32>
    %cst_61 = arith.constant dense<0.000000e+00> : vector<8xf32>
    %118 = vector.multi_reduction <add>, %113, %cst_61 [1] : vector<8x32xf32> to vector<8xf32>
    %119 = vector.shape_cast %118 : vector<8xf32> to vector<8x1xf32>
    %cst_62 = arith.constant 3.200000e+01 : f32
    %120 = vector.broadcast %cst_62 : f32 to vector<8x1xf32>
    %121 = arith.divf %119, %120 : vector<8x1xf32>
    %122 = vector.broadcast %121 : vector<8x1xf32> to vector<8x32xf32>
    %123 = arith.subf %113, %122 : vector<8x32xf32>
    %124 = arith.mulf %123, %123 : vector<8x32xf32>
    %cst_63 = arith.constant dense<0.000000e+00> : vector<8xf32>
    %125 = vector.multi_reduction <add>, %124, %cst_63 [1] : vector<8x32xf32> to vector<8xf32>
    %126 = vector.shape_cast %125 : vector<8xf32> to vector<8x1xf32>
    %cst_64 = arith.constant 3.200000e+01 : f32
    %127 = vector.broadcast %cst_64 : f32 to vector<8x1xf32>
    %128 = arith.divf %126, %127 : vector<8x1xf32>
    %129 = vector.broadcast %121 : vector<8x1xf32> to vector<8x32xf32>
    %130 = arith.subf %113, %129 : vector<8x32xf32>
    %cst_65 = arith.constant 9.99999996E-13 : f32
    %131 = vector.broadcast %cst_65 : f32 to vector<8x1xf32>
    %132 = arith.addf %128, %131 : vector<8x1xf32>
    %133 = math.rsqrt %132 : vector<8x1xf32>
    %134 = vector.broadcast %133 : vector<8x1xf32> to vector<8x32xf32>
    %135 = arith.mulf %130, %134 : vector<8x32xf32>
    %136 = vector.shape_cast %115 : vector<32xf32> to vector<1x32xf32>
    %137 = vector.broadcast %136 : vector<1x32xf32> to vector<8x32xf32>
    %138 = arith.mulf %135, %137 : vector<8x32xf32>
    %139 = vector.shape_cast %117 : vector<32xf32> to vector<1x32xf32>
    %140 = vector.broadcast %139 : vector<1x32xf32> to vector<8x32xf32>
    %141 = arith.addf %138, %140 : vector<8x32xf32>
    %142 = arith.truncf %141 : vector<8x32xf32> to vector<8x32xbf16>
    %cst_66 = arith.constant 0.000000e+00 : f32
    %143 = vector.broadcast %cst_66 : f32 to vector<8x32xf32>
    %c0_67 = arith.constant 0 : index
    %c0_68 = arith.constant 0 : index
    %144 = vector.load %arg17[%c0_67, %c0_68] : memref<1x32xf32, #tpu.memory_space<vmem>>, vector<1x32xf32>
    %145 = vector.shape_cast %144 : vector<1x32xf32> to vector<32xf32>
    %146 = vector.shape_cast %145 : vector<32xf32> to vector<1x32xf32>
    %147 = vector.broadcast %146 : vector<1x32xf32> to vector<8x32xf32>
    %148 = arith.addf %143, %147 : vector<8x32xf32>
    %c0_69 = arith.constant 0 : index
    %c0_70 = arith.constant 0 : index
    %149 = vector.load %arg14[%c0_69, %c0_70] : memref<32x64xbf16, #tpu.memory_space<vmem>>, vector<32x64xbf16>
    %cst_71 = arith.constant dense<0.000000e+00> : vector<8x64xf32>
    %150 = tpu.matmul %142, %149, %cst_71 {dimension_numbers = #tpu.dot_dimension_numbers<[1], [0], [0], [1], [0, 0, 1, 1], [], []>} : vector<8x32xbf16>, vector<32x64xbf16>, vector<8x64xf32> -> vector<8x64xf32>
    %c0_72 = arith.constant 0 : index
    %c0_73 = arith.constant 0 : index
    %151 = vector.load %arg15[%c0_72, %c0_73] : memref<1x64xf32, #tpu.memory_space<vmem>>, vector<1x64xf32>
    %152 = vector.broadcast %151 : vector<1x64xf32> to vector<8x64xf32>
    %153 = arith.addf %150, %152 : vector<8x64xf32>
    %cst_74 = arith.constant 5.000000e-01 : f32
    %154 = vector.broadcast %cst_74 : f32 to vector<8x64xf32>
    %155 = arith.mulf %154, %153 : vector<8x64xf32>
    %cst_75 = arith.constant 0.707106769 : f32
    %156 = vector.broadcast %cst_75 : f32 to vector<8x64xf32>
    %157 = arith.mulf %153, %156 : vector<8x64xf32>
    %158 = math.erf %157 : vector<8x64xf32>
    %cst_76 = arith.constant 1.000000e+00 : f32
    %159 = vector.broadcast %cst_76 : f32 to vector<8x64xf32>
    %160 = arith.addf %159, %158 : vector<8x64xf32>
    %161 = arith.mulf %155, %160 : vector<8x64xf32>
    %162 = arith.truncf %161 : vector<8x64xf32> to vector<8x64xbf16>
    %c0_77 = arith.constant 0 : index
    %c0_78 = arith.constant 0 : index
    %163 = vector.load %arg16[%c0_77, %c0_78] : memref<64x32xbf16, #tpu.memory_space<vmem>>, vector<64x32xbf16>
    %cst_79 = arith.constant dense<0.000000e+00> : vector<8x32xf32>
    %164 = tpu.matmul %162, %163, %cst_79 {dimension_numbers = #tpu.dot_dimension_numbers<[1], [0], [0], [1], [0, 0, 1, 1], [], []>} : vector<8x64xbf16>, vector<64x32xbf16>, vector<8x32xf32> -> vector<8x32xf32>
    %165 = arith.addf %148, %164 : vector<8x32xf32>
    %166 = arith.addf %165, %141 : vector<8x32xf32>
    %c0_80 = arith.constant 0 : index
    %c0_81 = arith.constant 0 : index
    %167 = vector.load %arg18[%c0_80, %c0_81] : memref<1x32xf32, #tpu.memory_space<vmem>>, vector<1x32xf32>
    %168 = vector.shape_cast %167 : vector<1x32xf32> to vector<32xf32>
    %c0_82 = arith.constant 0 : index
    %c0_83 = arith.constant 0 : index
    %169 = vector.load %arg19[%c0_82, %c0_83] : memref<1x32xf32, #tpu.memory_space<vmem>>, vector<1x32xf32>
    %170 = vector.shape_cast %169 : vector<1x32xf32> to vector<32xf32>
    %cst_84 = arith.constant dense<0.000000e+00> : vector<8xf32>
    %171 = vector.multi_reduction <add>, %166, %cst_84 [1] : vector<8x32xf32> to vector<8xf32>
    %172 = vector.shape_cast %171 : vector<8xf32> to vector<8x1xf32>
    %cst_85 = arith.constant 3.200000e+01 : f32
    %173 = vector.broadcast %cst_85 : f32 to vector<8x1xf32>
    %174 = arith.divf %172, %173 : vector<8x1xf32>
    %175 = vector.broadcast %174 : vector<8x1xf32> to vector<8x32xf32>
    %176 = arith.subf %166, %175 : vector<8x32xf32>
    %177 = arith.mulf %176, %176 : vector<8x32xf32>
    %cst_86 = arith.constant dense<0.000000e+00> : vector<8xf32>
    %178 = vector.multi_reduction <add>, %177, %cst_86 [1] : vector<8x32xf32> to vector<8xf32>
    %179 = vector.shape_cast %178 : vector<8xf32> to vector<8x1xf32>
    %cst_87 = arith.constant 3.200000e+01 : f32
    %180 = vector.broadcast %cst_87 : f32 to vector<8x1xf32>
    %181 = arith.divf %179, %180 : vector<8x1xf32>
    %182 = vector.broadcast %174 : vector<8x1xf32> to vector<8x32xf32>
    %183 = arith.subf %166, %182 : vector<8x32xf32>
    %cst_88 = arith.constant 9.99999996E-13 : f32
    %184 = vector.broadcast %cst_88 : f32 to vector<8x1xf32>
    %185 = arith.addf %181, %184 : vector<8x1xf32>
    %186 = math.rsqrt %185 : vector<8x1xf32>
    %187 = vector.broadcast %186 : vector<8x1xf32> to vector<8x32xf32>
    %188 = arith.mulf %183, %187 : vector<8x32xf32>
    %189 = vector.shape_cast %168 : vector<32xf32> to vector<1x32xf32>
    %190 = vector.broadcast %189 : vector<1x32xf32> to vector<8x32xf32>
    %191 = arith.mulf %188, %190 : vector<8x32xf32>
    %192 = vector.shape_cast %170 : vector<32xf32> to vector<1x32xf32>
    %193 = vector.broadcast %192 : vector<1x32xf32> to vector<8x32xf32>
    %194 = arith.addf %191, %193 : vector<8x32xf32>
    %c0_89 = arith.constant 0 : index
    %c0_90 = arith.constant 0 : index
    %c0_91 = arith.constant 0 : index
    %195 = vector.load %arg20[%c0_89, %c0_90, %c0_91] : memref<1x8x32xf32, #tpu.memory_space<vmem>>, vector<1x8x32xf32>
    %196 = vector.shape_cast %195 : vector<1x8x32xf32> to vector<8x32xf32>
    %197 = vector.shape_cast %194 : vector<8x32xf32> to vector<1x8x32xf32>
    tpu.vector_store %arg20[%c0_89, %c0_90, %c0_91], %197 {strides = array<i32>} : memref<1x8x32xf32, #tpu.memory_space<vmem>>, vector<1x8x32xf32>,
    return
  }
  func.func @transform_0(%arg0: i32, %arg1: i32) -> (i32, i32, i32) {
    %c0_i32 = arith.constant 0 : i32
    %c0_i32_0 = arith.constant 0 : i32
    return %arg0, %arg1, %c0_i32 : i32, i32, i32
  }
  func.func @transform_1(%arg0: i32, %arg1: i32) -> (i32, i32, i32) {
    %c0_i32 = arith.constant 0 : i32
    %c0_i32_0 = arith.constant 0 : i32
    %c0_i32_1 = arith.constant 0 : i32
    return %arg0, %c0_i32, %c0_i32_0 : i32, i32, i32
  }
  func.func @transform_2(%arg0: i32, %arg1: i32) -> (i32, i32) {
    %c0_i32 = arith.constant 0 : i32
    %c0_i32_0 = arith.constant 0 : i32
    %c0_i32_1 = arith.constant 0 : i32
    return %c0_i32, %c0_i32_0 : i32, i32
  }
  func.func @transform_3(%arg0: i32, %arg1: i32) -> (i32, i32) {
    %c0_i32 = arith.constant 0 : i32
    %c0_i32_0 = arith.constant 0 : i32
    %c0_i32_1 = arith.constant 0 : i32
    return %c0_i32, %c0_i32_0 : i32, i32
  }
  func.func @transform_4(%arg0: i32, %arg1: i32) -> (i32, i32) {
    %c0_i32 = arith.constant 0 : i32
    %c0_i32_0 = arith.constant 0 : i32
    %c0_i32_1 = arith.constant 0 : i32
    return %c0_i32, %c0_i32_0 : i32, i32
  }
  func.func @transform_5(%arg0: i32, %arg1: i32) -> (i32, i32) {
    %c0_i32 = arith.constant 0 : i32
    %c0_i32_0 = arith.constant 0 : i32
    %c0_i32_1 = arith.constant 0 : i32
    return %c0_i32, %c0_i32_0 : i32, i32
  }
  func.func @transform_6(%arg0: i32, %arg1: i32) -> (i32, i32) {
    %c0_i32 = arith.constant 0 : i32
    %c0_i32_0 = arith.constant 0 : i32
    %c0_i32_1 = arith.constant 0 : i32
    return %c0_i32, %c0_i32_0 : i32, i32
  }
  func.func @transform_7(%arg0: i32, %arg1: i32) -> (i32, i32) {
    %c0_i32 = arith.constant 0 : i32
    %c0_i32_0 = arith.constant 0 : i32
    %c0_i32_1 = arith.constant 0 : i32
    return %c0_i32, %c0_i32_0 : i32, i32
  }
  func.func @transform_8(%arg0: i32, %arg1: i32) -> (i32, i32) {
    %c0_i32 = arith.constant 0 : i32
    %c0_i32_0 = arith.constant 0 : i32
    %c0_i32_1 = arith.constant 0 : i32
    return %c0_i32, %c0_i32_0 : i32, i32
  }
  func.func @transform_9(%arg0: i32, %arg1: i32) -> (i32, i32) {
    %c0_i32 = arith.constant 0 : i32
    %c0_i32_0 = arith.constant 0 : i32
    %c0_i32_1 = arith.constant 0 : i32
    return %c0_i32, %c0_i32_0 : i32, i32
  }
  func.func @transform_10(%arg0: i32, %arg1: i32) -> (i32, i32) {
    %c0_i32 = arith.constant 0 : i32
    %c0_i32_0 = arith.constant 0 : i32
    %c0_i32_1 = arith.constant 0 : i32
    return %c0_i32, %c0_i32_0 : i32, i32
  }
  func.func @transform_11(%arg0: i32, %arg1: i32) -> (i32, i32) {
    %c0_i32 = arith.constant 0 : i32
    %c0_i32_0 = arith.constant 0 : i32
    %c0_i32_1 = arith.constant 0 : i32
    return %c0_i32, %c0_i32_0 : i32, i32
  }
  func.func @transform_12(%arg0: i32, %arg1: i32) -> (i32, i32) {
    %c0_i32 = arith.constant 0 : i32
    %c0_i32_0 = arith.constant 0 : i32
    %c0_i32_1 = arith.constant 0 : i32
    return %c0_i32, %c0_i32_0 : i32, i32
  }
  func.func @transform_13(%arg0: i32, %arg1: i32) -> (i32, i32) {
    %c0_i32 = arith.constant 0 : i32
    %c0_i32_0 = arith.constant 0 : i32
    %c0_i32_1 = arith.constant 0 : i32
    return %c0_i32, %c0_i32_0 : i32, i32
  }
  func.func @transform_14(%arg0: i32, %arg1: i32) -> (i32, i32) {
    %c0_i32 = arith.constant 0 : i32
    %c0_i32_0 = arith.constant 0 : i32
    %c0_i32_1 = arith.constant 0 : i32
    return %c0_i32, %c0_i32_0 : i32, i32
  }
  func.func @transform_15(%arg0: i32, %arg1: i32) -> (i32, i32) {
    %c0_i32 = arith.constant 0 : i32
    %c0_i32_0 = arith.constant 0 : i32
    %c0_i32_1 = arith.constant 0 : i32
    return %c0_i32, %c0_i32_0 : i32, i32
  }
  func.func @transform_16(%arg0: i32, %arg1: i32) -> (i32, i32) {
    %c0_i32 = arith.constant 0 : i32
    %c0_i32_0 = arith.constant 0 : i32
    %c0_i32_1 = arith.constant 0 : i32
    return %c0_i32, %c0_i32_0 : i32, i32
  }
  func.func @transform_17(%arg0: i32, %arg1: i32) -> (i32, i32) {
    %c0_i32 = arith.constant 0 : i32
    %c0_i32_0 = arith.constant 0 : i32
    %c0_i32_1 = arith.constant 0 : i32
    return %c0_i32, %c0_i32_0 : i32, i32
  }
  func.func @transform_18(%arg0: i32, %arg1: i32) -> (i32, i32, i32) {
    %c0_i32 = arith.constant 0 : i32
    %c0_i32_0 = arith.constant 0 : i32
    return %arg0, %arg1, %c0_i32 : i32, i32, i32
  }
}

</mosaic_0001>

<llo_original>
// kernel: tpu_custom_call.1
$region0: #{tpu_custom_call.1}
  #allocation0 [shape = 'u32[]', space=smem, size = 0x4, offset = 0x4, fixed_abs, tag = 'smem constant byte address 0x4 - core index']
  #allocation1 [shape = 'u32[144,128]{1,0:T(1,128)}', space=vmem, size = 0x12000, scoped, tag = 'internal scratch']
  #allocation2 [shape = 'bf16[4,16,8]{2,1,0:T(8,128)(2,1)}', space=vmem, size = 0x4000, scoped, tag = 'scratch operand']
  #allocation3 [shape = 'bf16[4,16,8]{2,1,0:T(8,128)(2,1)}', space=vmem, size = 0x4000, scoped, tag = 'scratch operand']
  %s0 = inlined_call_operand.vmem [shape: f32[2,16,32], index: 0, kind: input, shape index: {}]
  %s1 = inlined_call_operand.vmem [shape: bf16[2,16,32], index: 1, kind: input, shape index: {}]
  %s2 = inlined_call_operand.hbm [shape: bf16[32,32], index: 2, kind: input, shape index: {}]
  %s3 = inlined_call_operand.vmem [shape: f32[1,32], index: 3, kind: input, shape index: {}]
  %s4 = inlined_call_operand.hbm [shape: bf16[32,32], index: 4, kind: input, shape index: {}]
  %s5 = inlined_call_operand.vmem [shape: f32[1,32], index: 5, kind: input, shape index: {}]
  %s6 = inlined_call_operand.hbm [shape: bf16[32,32], index: 6, kind: input, shape index: {}]
  %s7 = inlined_call_operand.vmem [shape: f32[1,32], index: 7, kind: input, shape index: {}]
  %s8 = inlined_call_operand.hbm [shape: bf16[32,32], index: 8, kind: input, shape index: {}]
  %s9 = inlined_call_operand.vmem [shape: f32[1,32], index: 9, kind: input, shape index: {}]
  %s10 = inlined_call_operand.vmem [shape: f32[1,32], index: 10, kind: input, shape index: {}]
  %s11 = inlined_call_operand.vmem [shape: f32[1,32], index: 11, kind: input, shape index: {}]
  %s12 = inlined_call_operand.hbm [shape: bf16[32,64], index: 12, kind: input, shape index: {}]
  %s13 = inlined_call_operand.vmem [shape: f32[1,64], index: 13, kind: input, shape index: {}]
  %s14 = inlined_call_operand.vmem [shape: bf16[64,32], index: 14, kind: input, shape index: {}]
  %s15 = inlined_call_operand.vmem [shape: f32[1,32], index: 15, kind: input, shape index: {}]
  %s16 = inlined_call_operand.vmem [shape: f32[1,32], index: 16, kind: input, shape index: {}]
  %s17 = inlined_call_operand.vmem [shape: f32[1,32], index: 17, kind: input, shape index: {}]
  %s18 = inlined_call_operand.hbm [shape: f32[2,16,32], index: 18, kind: output, shape index: {}]
  %s19 = sld [smem:[#allocation0]]
  $region129: #{tpu_custom_call.1} parent=0
    _
  %s21 = ssub.s32 1, %s19
  %s22 = scalar_select 0, %s21, %s19
  $region1: #{tpu_custom_call.1} parent=0
    #allocation4 [shape = 'u8[8192]{0}', space=vmem, size = 0x2000, scoped, tag = 'input window, operand 2, single buffered']
    #allocation5 [shape = 's32[2]{0}', space=sflag, size = 0x8, scoped, tag = 'scoped memory for tpu_custom_call.1']
    #allocation6 [shape = 's32[2]{0}', space=sflag, size = 0x8, scoped, tag = 'scoped memory for tpu_custom_call.1']
    #allocation7 [shape = 'u8[8192]{0}', space=vmem, size = 0x2000, scoped, tag = 'input window, operand 4, single buffered']
    #allocation8 [shape = 's32[1]{0}', space=sflag, size = 0x4, scoped, tag = 'scoped memory for tpu_custom_call.1']
    #allocation9 [shape = 'u8[8192]{0}', space=vmem, size = 0x2000, scoped, tag = 'input window, operand 6, single buffered']
    #allocation10 [shape = 'u8[8192]{0}', space=vmem, size = 0x2000, scoped, tag = 'input window, operand 8, single buffered']
    #allocation11 [shape = 's32[1]{0}', space=sflag, size = 0x4, scoped, tag = 'scoped memory for tpu_custom_call.1']
    #allocation12 [shape = 'u8[8192]{0}', space=vmem, size = 0x2000, scoped, tag = 'input window, operand 12, single buffered']
    #allocation13 [shape = 'u8[8192]{0}', space=vmem, size = 0x2000, scoped, tag = 'output window, operand 0']
    %23 = vsyncpa [#allocation5], 0
    %24 = vsyncpa [#allocation8], 0
    %25 = vsyncpa [#allocation11], 0
    %26 = vsyncpa [#allocation6], 0
    %s27 = scalar_lea.sflag [#allocation6], 1
    %28 = vsyncpa %s27, 0
    loop: start=0, step=1, limit=6
    $region2: #{tpu_custom_call.1} parent=1 // loop_pre_header
      _
    $region3: #{tpu_custom_call.1} parent=1 // loop_header
      %s30 = sphi 0, %s34
      %p31 = scmp.ge.s32.totalorder %s30, 6
      %s37 = sphi 0, %s49
      %s38 = sphi 0, %s45
      %s39 = sphi 0, %s37
      %s40 = sphi 0, %s38
      %s41 = sphi 0, %s39
      %s42 = sphi 0, %s40
      %s54 = sphi 0, %s56
      %s57 = sphi 0, %s54
      %s58 = sphi 0, %s57
      %s74 = sphi 0, %s58
      %s80 = sphi 0, %s82
      %s83 = sphi 0, %s80
      %s84 = sphi 0, %s83
      %s100 = sphi 0, %s84
      %s104 = sphi 0, %s104
      %s106 = sphi 0, %s104
      %s107 = sphi 0, %s106
      %s121 = sphi 0, %s107
      %s125 = sphi 0, %s125
      %s127 = sphi 0, %s125
      %s128 = sphi 0, %s127
      %s142 = sphi 0, %s128
      %s146 = sphi 0, %s146
      %s148 = sphi 0, %s146
      %s149 = sphi 0, %s148
      %s163 = sphi 0, %s149
      %s167 = sphi 0, %s167
      %s169 = sphi 0, %s167
      %s170 = sphi 0, %s169
      %s184 = sphi 0, %s170
      %s188 = sphi 0, %s188
      %s190 = sphi 0, %s188
      %s191 = sphi 0, %s190
      %s205 = sphi 0, %s191
      %s209 = sphi 0, %s209
      %s211 = sphi 0, %s209
      %s212 = sphi 0, %s211
      %s226 = sphi 0, %s212
      %s230 = sphi 0, %s230
      %s232 = sphi 0, %s230
      %s233 = sphi 0, %s232
      %s247 = sphi 0, %s233
      %s251 = sphi 0, %s251
      %s253 = sphi 0, %s251
      %s254 = sphi 0, %s253
      %s268 = sphi 0, %s254
      %s272 = sphi 0, %s272
      %s274 = sphi 0, %s272
      %s275 = sphi 0, %s274
      %s289 = sphi 0, %s275
      %s293 = sphi 0, %s293
      %s295 = sphi 0, %s293
      %s296 = sphi 0, %s295
      %s310 = sphi 0, %s296
      %s314 = sphi 0, %s314
      %s316 = sphi 0, %s314
      %s317 = sphi 0, %s316
      %s331 = sphi 0, %s317
      %s335 = sphi 0, %s335
      %s337 = sphi 0, %s335
      %s338 = sphi 0, %s337
      %s352 = sphi 0, %s338
      %s356 = sphi 0, %s356
      %s358 = sphi 0, %s356
      %s359 = sphi 0, %s358
      %s373 = sphi 0, %s359
      %s377 = sphi 0, %s377
      %s379 = sphi 0, %s377
      %s380 = sphi 0, %s379
      %s394 = sphi 0, %s380
      %s398 = sphi 0, %s398
      %s400 = sphi 0, %s398
      %s401 = sphi 0, %s400
      %s415 = sphi 0, %s401
      %s419 = sphi 0, %s419
      %s421 = sphi 0, %s419
      %s422 = sphi 0, %s421
      %s436 = sphi 0, %s422
      %s444 = sphi 0, %s446
      %s447 = sphi 0, %s444
      %s448 = sphi 0, %s447
      %s464 = sphi 0, %s448
    $region4: #{tpu_custom_call.1} parent=1 // loop_header_branch
      %33 = sbr.rel (%p31) target = $region8
    $region5: #{tpu_custom_call.1} parent=1 // loop_body
      %s35 = ssub.s32 %s30, 1
      %s36 = ssub.s32 %s30, 2
      %s43 = sadd.s32 1, %s38
      %p44 = scmp.ge.s32.totalorder %s43, 2
      %s45 = scalar_select %p44, 0, %s43
      %s46 = sadd.s32 1, %s37
      %s47 = scalar_select %p44, %s46, %s37
      %p48 = scmp.ge.s32.totalorder %s47, 2
      %s49 = scalar_select %p48, 0, %s47
      %s50 = ssub.s32 %s37, %s49
      %s51 = ssub.s32 %s38, %s45
      %s52 = sor.u32 %s50, %s51
      %p53 = scmp.eq.s32.totalorder %s52, 0
      %s55 = sadd.s32 %s54, 1
      %s56 = scalar_select %p53, %s54, %s55
      %p59 = pneg %p53
      %p60 = scmp.eq.s32.totalorder %s30, 3
      %p61 = por %p59, %p60
      %p62 = scmp.ne.s32.totalorder %s54, %s57
      %p63 = scmp.eq.s32.totalorder %s30, 0
      %p64 = por %p62, %p63
      %p65 = scmp.ne.s32.totalorder %s54, %s57
      %p66 = scmp.eq.s32.totalorder %s35, 3
      %p67 = por %p65, %p66
      %p68 = scmp.ne.s32.totalorder %s57, %s58
      %p69 = scmp.eq.s32.totalorder %s35, 0
      %p70 = por %p68, %p69
      %p71 = scmp.ne.s32.totalorder %s57, %s58
      %p72 = scmp.eq.s32.totalorder %s36, 3
      %p73 = por %p71, %p72
      %p75 = scmp.ne.s32.totalorder %s58, %s74
      %p76 = scmp.eq.s32.totalorder %s36, 0
      %p77 = por %p75, %p76
      %s78 = ssub.s32 %s37, %s49
      %p79 = scmp.eq.s32.totalorder %s78, 0
      %s81 = sadd.s32 %s80, 1
      %s82 = scalar_select %p79, %s80, %s81
      %p85 = pneg %p79
      %p86 = scmp.eq.s32.totalorder %s30, 3
      %p87 = por %p85, %p86
      %p88 = scmp.ne.s32.totalorder %s80, %s83
      %p89 = scmp.eq.s32.totalorder %s30, 0
      %p90 = por %p88, %p89
      %p91 = scmp.ne.s32.totalorder %s80, %s83
      %p92 = scmp.eq.s32.totalorder %s35, 3
      %p93 = por %p91, %p92
      %p94 = scmp.ne.s32.totalorder %s83, %s84
      %p95 = scmp.eq.s32.totalorder %s35, 0
      %p96 = por %p94, %p95
      %p97 = scmp.ne.s32.totalorder %s83, %s84
      %p98 = scmp.eq.s32.totalorder %s36, 3
      %p99 = por %p97, %p98
      %p101 = scmp.ne.s32.totalorder %s84, %s100
      %p102 = scmp.eq.s32.totalorder %s36, 0
      %p103 = por %p101, %p102
      %s105 = sadd.s32 %s104, 1
      %p108 = scmp.eq.s32.totalorder %s30, 3
      %p109 = scmp.ne.s32.totalorder %s104, %s106
      %p110 = scmp.eq.s32.totalorder %s30, 0
      %p111 = por %p109, %p110
      %p112 = scmp.ne.s32.totalorder %s104, %s106
      %p113 = scmp.eq.s32.totalorder %s35, 3
      %p114 = por %p112, %p113
      %p115 = scmp.ne.s32.totalorder %s106, %s107
      %p116 = scmp.eq.s32.totalorder %s35, 0
      %p117 = por %p115, %p116
      %p118 = scmp.ne.s32.totalorder %s106, %s107
      %p119 = scmp.eq.s32.totalorder %s36, 3
      %p120 = por %p118, %p119
      %p122 = scmp.ne.s32.totalorder %s107, %s121
      %p123 = scmp.eq.s32.totalorder %s36, 0
      %p124 = por %p122, %p123
      %s126 = sadd.s32 %s125, 1
      %p129 = scmp.eq.s32.totalorder %s30, 3
      %p130 = scmp.ne.s32.totalorder %s125, %s127
      %p131 = scmp.eq.s32.totalorder %s30, 0
      %p132 = por %p130, %p131
      %p133 = scmp.ne.s32.totalorder %s125, %s127
      %p134 = scmp.eq.s32.totalorder %s35, 3
      %p135 = por %p133, %p134
      %p136 = scmp.ne.s32.totalorder %s127, %s128
      %p137 = scmp.eq.s32.totalorder %s35, 0
      %p138 = por %p136, %p137
      %p139 = scmp.ne.s32.totalorder %s127, %s128
      %p140 = scmp.eq.s32.totalorder %s36, 3
      %p141 = por %p139, %p140
      %p143 = scmp.ne.s32.totalorder %s128, %s142
      %p144 = scmp.eq.s32.totalorder %s36, 0
      %p145 = por %p143, %p144
      %s147 = sadd.s32 %s146, 1
      %p150 = scmp.eq.s32.totalorder %s30, 3
      %p151 = scmp.ne.s32.totalorder %s146, %s148
      %p152 = scmp.eq.s32.totalorder %s30, 0
      %p153 = por %p151, %p152
      %p154 = scmp.ne.s32.totalorder %s146, %s148
      %p155 = scmp.eq.s32.totalorder %s35, 3
      %p156 = por %p154, %p155
      %p157 = scmp.ne.s32.totalorder %s148, %s149
      %p158 = scmp.eq.s32.totalorder %s35, 0
      %p159 = por %p157, %p158
      %p160 = scmp.ne.s32.totalorder %s148, %s149
      %p161 = scmp.eq.s32.totalorder %s36, 3
      %p162 = por %p160, %p161
      %p164 = scmp.ne.s32.totalorder %s149, %s163
      %p165 = scmp.eq.s32.totalorder %s36, 0
      %p166 = por %p164, %p165
      %s168 = sadd.s32 %s167, 1
      %p171 = scmp.eq.s32.totalorder %s30, 3
      %p172 = scmp.ne.s32.totalorder %s167, %s169
      %p173 = scmp.eq.s32.totalorder %s30, 0
      %p174 = por %p172, %p173
      %p175 = scmp.ne.s32.totalorder %s167, %s169
      %p176 = scmp.eq.s32.totalorder %s35, 3
      %p177 = por %p175, %p176
      %p178 = scmp.ne.s32.totalorder %s169, %s170
      %p179 = scmp.eq.s32.totalorder %s35, 0
      %p180 = por %p178, %p179
      %p181 = scmp.ne.s32.totalorder %s169, %s170
      %p182 = scmp.eq.s32.totalorder %s36, 3
      %p183 = por %p181, %p182
      %p185 = scmp.ne.s32.totalorder %s170, %s184
      %p186 = scmp.eq.s32.totalorder %s36, 0
      %p187 = por %p185, %p186
      %s189 = sadd.s32 %s188, 1
      %p192 = scmp.eq.s32.totalorder %s30, 3
      %p193 = scmp.ne.s32.totalorder %s188, %s190
      %p194 = scmp.eq.s32.totalorder %s30, 0
      %p195 = por %p193, %p194
      %p196 = scmp.ne.s32.totalorder %s188, %s190
      %p197 = scmp.eq.s32.totalorder %s35, 3
      %p198 = por %p196, %p197
      %p199 = scmp.ne.s32.totalorder %s190, %s191
      %p200 = scmp.eq.s32.totalorder %s35, 0
      %p201 = por %p199, %p200
      %p202 = scmp.ne.s32.totalorder %s190, %s191
      %p203 = scmp.eq.s32.totalorder %s36, 3
      %p204 = por %p202, %p203
      %p206 = scmp.ne.s32.totalorder %s191, %s205
      %p207 = scmp.eq.s32.totalorder %s36, 0
      %p208 = por %p206, %p207
      %s210 = sadd.s32 %s209, 1
      %p213 = scmp.eq.s32.totalorder %s30, 3
      %p214 = scmp.ne.s32.totalorder %s209, %s211
      %p215 = scmp.eq.s32.totalorder %s30, 0
      %p216 = por %p214, %p215
      %p217 = scmp.ne.s32.totalorder %s209, %s211
      %p218 = scmp.eq.s32.totalorder %s35, 3
      %p219 = por %p217, %p218
      %p220 = scmp.ne.s32.totalorder %s211, %s212
      %p221 = scmp.eq.s32.totalorder %s35, 0
      %p222 = por %p220, %p221
      %p223 = scmp.ne.s32.totalorder %s211, %s212
      %p224 = scmp.eq.s32.totalorder %s36, 3
      %p225 = por %p223, %p224
      %p227 = scmp.ne.s32.totalorder %s212, %s226
      %p228 = scmp.eq.s32.totalorder %s36, 0
      %p229 = por %p227, %p228
      %s231 = sadd.s32 %s230, 1
      %p234 = scmp.eq.s32.totalorder %s30, 3
      %p235 = scmp.ne.s32.totalorder %s230, %s232
      %p236 = scmp.eq.s32.totalorder %s30, 0
      %p237 = por %p235, %p236
      %p238 = scmp.ne.s32.totalorder %s230, %s232
      %p239 = scmp.eq.s32.totalorder %s35, 3
      %p240 = por %p238, %p239
      %p241 = scmp.ne.s32.totalorder %s232, %s233
      %p242 = scmp.eq.s32.totalorder %s35, 0
      %p243 = por %p241, %p242
      %p244 = scmp.ne.s32.totalorder %s232, %s233
      %p245 = scmp.eq.s32.totalorder %s36, 3
      %p246 = por %p244, %p245
      %p248 = scmp.ne.s32.totalorder %s233, %s247
      %p249 = scmp.eq.s32.totalorder %s36, 0
      %p250 = por %p248, %p249
      %s252 = sadd.s32 %s251, 1
      %p255 = scmp.eq.s32.totalorder %s30, 3
      %p256 = scmp.ne.s32.totalorder %s251, %s253
      %p257 = scmp.eq.s32.totalorder %s30, 0
      %p258 = por %p256, %p257
      %p259 = scmp.ne.s32.totalorder %s251, %s253
      %p260 = scmp.eq.s32.totalorder %s35, 3
      %p261 = por %p259, %p260
      %p262 = scmp.ne.s32.totalorder %s253, %s254
      %p263 = scmp.eq.s32.totalorder %s35, 0
      %p264 = por %p262, %p263
      %p265 = scmp.ne.s32.totalorder %s253, %s254
      %p266 = scmp.eq.s32.totalorder %s36, 3
      %p267 = por %p265, %p266
      %p269 = scmp.ne.s32.totalorder %s254, %s268
      %p270 = scmp.eq.s32.totalorder %s36, 0
      %p271 = por %p269, %p270
      %s273 = sadd.s32 %s272, 1
      %p276 = scmp.eq.s32.totalorder %s30, 3
      %p277 = scmp.ne.s32.totalorder %s272, %s274
      %p278 = scmp.eq.s32.totalorder %s30, 0
      %p279 = por %p277, %p278
      %p280 = scmp.ne.s32.totalorder %s272, %s274
      %p281 = scmp.eq.s32.totalorder %s35, 3
      %p282 = por %p280, %p281
      %p283 = scmp.ne.s32.totalorder %s274, %s275
      %p284 = scmp.eq.s32.totalorder %s35, 0
      %p285 = por %p283, %p284
      %p286 = scmp.ne.s32.totalorder %s274, %s275
      %p287 = scmp.eq.s32.totalorder %s36, 3
      %p288 = por %p286, %p287
      %p290 = scmp.ne.s32.totalorder %s275, %s289
      %p291 = scmp.eq.s32.totalorder %s36, 0
      %p292 = por %p290, %p291
      %s294 = sadd.s32 %s293, 1
      %p297 = scmp.eq.s32.totalorder %s30, 3
      %p298 = scmp.ne.s32.totalorder %s293, %s295
      %p299 = scmp.eq.s32.totalorder %s30, 0
      %p300 = por %p298, %p299
      %p301 = scmp.ne.s32.totalorder %s293, %s295
      %p302 = scmp.eq.s32.totalorder %s35, 3
      %p303 = por %p301, %p302
      %p304 = scmp.ne.s32.totalorder %s295, %s296
      %p305 = scmp.eq.s32.totalorder %s35, 0
      %p306 = por %p304, %p305
      %p307 = scmp.ne.s32.totalorder %s295, %s296
      %p308 = scmp.eq.s32.totalorder %s36, 3
      %p309 = por %p307, %p308
      %p311 = scmp.ne.s32.totalorder %s296, %s310
      %p312 = scmp.eq.s32.totalorder %s36, 0
      %p313 = por %p311, %p312
      %s315 = sadd.s32 %s314, 1
      %p318 = scmp.eq.s32.totalorder %s30, 3
      %p319 = scmp.ne.s32.totalorder %s314, %s316
      %p320 = scmp.eq.s32.totalorder %s30, 0
      %p321 = por %p319, %p320
      %p322 = scmp.ne.s32.totalorder %s314, %s316
      %p323 = scmp.eq.s32.totalorder %s35, 3
      %p324 = por %p322, %p323
      %p325 = scmp.ne.s32.totalorder %s316, %s317
      %p326 = scmp.eq.s32.totalorder %s35, 0
      %p327 = por %p325, %p326
      %p328 = scmp.ne.s32.totalorder %s316, %s317
      %p329 = scmp.eq.s32.totalorder %s36, 3
      %p330 = por %p328, %p329
      %p332 = scmp.ne.s32.totalorder %s317, %s331
      %p333 = scmp.eq.s32.totalorder %s36, 0
      %p334 = por %p332, %p333
      %s336 = sadd.s32 %s335, 1
      %p339 = scmp.eq.s32.totalorder %s30, 3
      %p340 = scmp.ne.s32.totalorder %s335, %s337
      %p341 = scmp.eq.s32.totalorder %s30, 0
      %p342 = por %p340, %p341
      %p343 = scmp.ne.s32.totalorder %s335, %s337
      %p344 = scmp.eq.s32.totalorder %s35, 3
      %p345 = por %p343, %p344
      %p346 = scmp.ne.s32.totalorder %s337, %s338
      %p347 = scmp.eq.s32.totalorder %s35, 0
      %p348 = por %p346, %p347
      %p349 = scmp.ne.s32.totalorder %s337, %s338
      %p350 = scmp.eq.s32.totalorder %s36, 3
      %p351 = por %p349, %p350
      %p353 = scmp.ne.s32.totalorder %s338, %s352
      %p354 = scmp.eq.s32.totalorder %s36, 0
      %p355 = por %p353, %p354
      %s357 = sadd.s32 %s356, 1
      %p360 = scmp.eq.s32.totalorder %s30, 3
      %p361 = scmp.ne.s32.totalorder %s356, %s358
      %p362 = scmp.eq.s32.totalorder %s30, 0
      %p363 = por %p361, %p362
      %p364 = scmp.ne.s32.totalorder %s356, %s358
      %p365 = scmp.eq.s32.totalorder %s35, 3
      %p366 = por %p364, %p365
      %p367 = scmp.ne.s32.totalorder %s358, %s359
      %p368 = scmp.eq.s32.totalorder %s35, 0
      %p369 = por %p367, %p368
      %p370 = scmp.ne.s32.totalorder %s358, %s359
      %p371 = scmp.eq.s32.totalorder %s36, 3
      %p372 = por %p370, %p371
      %p374 = scmp.ne.s32.totalorder %s359, %s373
      %p375 = scmp.eq.s32.totalorder %s36, 0
      %p376 = por %p374, %p375
      %s378 = sadd.s32 %s377, 1
      %p381 = scmp.eq.s32.totalorder %s30, 3
      %p382 = scmp.ne.s32.totalorder %s377, %s379
      %p383 = scmp.eq.s32.totalorder %s30, 0
      %p384 = por %p382, %p383
      %p385 = scmp.ne.s32.totalorder %s377, %s379
      %p386 = scmp.eq.s32.totalorder %s35, 3
      %p387 = por %p385, %p386
      %p388 = scmp.ne.s32.totalorder %s379, %s380
      %p389 = scmp.eq.s32.totalorder %s35, 0
      %p390 = por %p388, %p389
      %p391 = scmp.ne.s32.totalorder %s379, %s380
      %p392 = scmp.eq.s32.totalorder %s36, 3
      %p393 = por %p391, %p392
      %p395 = scmp.ne.s32.totalorder %s380, %s394
      %p396 = scmp.eq.s32.totalorder %s36, 0
      %p397 = por %p395, %p396
      %s399 = sadd.s32 %s398, 1
      %p402 = scmp.eq.s32.totalorder %s30, 3
      %p403 = scmp.ne.s32.totalorder %s398, %s400
      %p404 = scmp.eq.s32.totalorder %s30, 0
      %p405 = por %p403, %p404
      %p406 = scmp.ne.s32.totalorder %s398, %s400
      %p407 = scmp.eq.s32.totalorder %s35, 3
      %p408 = por %p406, %p407
      %p409 = scmp.ne.s32.totalorder %s400, %s401
      %p410 = scmp.eq.s32.totalorder %s35, 0
      %p411 = por %p409, %p410
      %p412 = scmp.ne.s32.totalorder %s400, %s401
      %p413 = scmp.eq.s32.totalorder %s36, 3
      %p414 = por %p412, %p413
      %p416 = scmp.ne.s32.totalorder %s401, %s415
      %p417 = scmp.eq.s32.totalorder %s36, 0
      %p418 = por %p416, %p417
      %s420 = sadd.s32 %s419, 1
      %p423 = scmp.eq.s32.totalorder %s30, 3
      %p424 = scmp.ne.s32.totalorder %s419, %s421
      %p425 = scmp.eq.s32.totalorder %s30, 0
      %p426 = por %p424, %p425
      %p427 = scmp.ne.s32.totalorder %s419, %s421
      %p428 = scmp.eq.s32.totalorder %s35, 3
      %p429 = por %p427, %p428
      %p430 = scmp.ne.s32.totalorder %s421, %s422
      %p431 = scmp.eq.s32.totalorder %s35, 0
      %p432 = por %p430, %p431
      %p433 = scmp.ne.s32.totalorder %s421, %s422
      %p434 = scmp.eq.s32.totalorder %s36, 3
      %p435 = por %p433, %p434
      %p437 = scmp.ne.s32.totalorder %s422, %s436
      %p438 = scmp.eq.s32.totalorder %s36, 0
      %p439 = por %p437, %p438
      %s440 = ssub.s32 %s37, %s49
      %s441 = ssub.s32 %s38, %s45
      %s442 = sor.u32 %s440, %s441
      %p443 = scmp.eq.s32.totalorder %s442, 0
      %s445 = sadd.s32 %s444, 1
      %s446 = scalar_select %p443, %s444, %s445
      %p449 = pneg %p443
      %p450 = scmp.eq.s32.totalorder %s30, 3
      %p451 = por %p449, %p450
      %p452 = scmp.ne.s32.totalorder %s444, %s447
      %p453 = scmp.eq.s32.totalorder %s30, 0
      %p454 = por %p452, %p453
      %p455 = scmp.ne.s32.totalorder %s444, %s447
      %p456 = scmp.eq.s32.totalorder %s35, 3
      %p457 = por %p455, %p456
      %p458 = scmp.ne.s32.totalorder %s447, %s448
      %p459 = scmp.eq.s32.totalorder %s35, 0
      %p460 = por %p458, %p459
      %p461 = scmp.ne.s32.totalorder %s447, %s448
      %p462 = scmp.eq.s32.totalorder %s36, 3
      %p463 = por %p461, %p462
      %p465 = scmp.ne.s32.totalorder %s448, %s464
      %p466 = scmp.eq.s32.totalorder %s36, 0
      %p467 = por %p465, %p466
      %p468 = scmp.le.s32.totalorder 1, %s30
      %p469 = scmp.lt.s32.totalorder %s30, 5
      %p470 = pnand %p468, %p469
      %p471 = pneg %p470
      // Predicated region
      $region9: #{tpu_custom_call.1} parent=5 // pred_check
        _
      $region10: #{tpu_custom_call.1} parent=5 // pred_check_branch
        %473 = sbr.rel (%p470) target = $region12
      $region11: #{tpu_custom_call.1} parent=5 // pred_region
        %s474 = ssub.s32 %s30, 1
        // Predicated region
        $region13: #{tpu_custom_call.1} parent=11 // pred_check
          %p475 = pneg %p117
        $region14: #{tpu_custom_call.1} parent=11 // pred_check_branch
          %477 = sbr.rel (%p475) target = $region16
        $region15: #{tpu_custom_call.1} parent=11 // pred_region
          %s479 = ssub.s32 256, 256
          %480 = vsyncadd [#allocation5], %s479
          %s481 = sshll.u32 [#allocation4], 4
          %s482 = int_to_ptr.vmem [resolvable:$true] %s481
          %487 = dma.hbm_to_vmem [thread:$0]  %s2, 256, %s482, [#allocation5], 64, 64, 4
        $region16: #{tpu_custom_call.1} parent=11 // pred_fallthru
          _
        // Predicated region
        $region17: #{tpu_custom_call.1} parent=11 // pred_check
          %p488 = pneg %p138
        $region18: #{tpu_custom_call.1} parent=11 // pred_check_branch
          %490 = sbr.rel (%p488) target = $region20
        $region19: #{tpu_custom_call.1} parent=11 // pred_region
          _
        $region20: #{tpu_custom_call.1} parent=11 // pred_fallthru
          _
        // Predicated region
        $region21: #{tpu_custom_call.1} parent=11 // pred_check
          %p491 = pneg %p159
        $region22: #{tpu_custom_call.1} parent=11 // pred_check_branch
          %493 = sbr.rel (%p491) target = $region24
        $region23: #{tpu_custom_call.1} parent=11 // pred_region
          %s495 = ssub.s32 256, 256
          %496 = vsyncadd [#allocation8], %s495
          %s497 = sshll.u32 [#allocation7], 4
          %s498 = int_to_ptr.vmem [resolvable:$true] %s497
          %503 = dma.hbm_to_vmem [thread:$0]  %s4, 256, %s498, [#allocation8], 64, 64, 4
        $region24: #{tpu_custom_call.1} parent=11 // pred_fallthru
          _
        // Predicated region
        $region25: #{tpu_custom_call.1} parent=11 // pred_check
          %p504 = pneg %p180
        $region26: #{tpu_custom_call.1} parent=11 // pred_check_branch
          %506 = sbr.rel (%p504) target = $region28
        $region27: #{tpu_custom_call.1} parent=11 // pred_region
          _
        $region28: #{tpu_custom_call.1} parent=11 // pred_fallthru
          _
        // Predicated region
        $region29: #{tpu_custom_call.1} parent=11 // pred_check
          %p507 = pneg %p201
        $region30: #{tpu_custom_call.1} parent=11 // pred_check_branch
          %509 = sbr.rel (%p507) target = $region32
        $region31: #{tpu_custom_call.1} parent=11 // pred_region
          %s511 = ssub.s32 256, 256
          %512 = vsyncadd [#allocation8], %s511
          %s513 = sshll.u32 [#allocation9], 4
          %s514 = int_to_ptr.vmem [resolvable:$true] %s513
          %519 = dma.hbm_to_vmem [thread:$0]  %s6, 256, %s514, [#allocation8], 64, 64, 4
        $region32: #{tpu_custom_call.1} parent=11 // pred_fallthru
          _
        // Predicated region
        $region33: #{tpu_custom_call.1} parent=11 // pred_check
          %p520 = pneg %p222
        $region34: #{tpu_custom_call.1} parent=11 // pred_check_branch
          %522 = sbr.rel (%p520) target = $region36
        $region35: #{tpu_custom_call.1} parent=11 // pred_region
          _
        $region36: #{tpu_custom_call.1} parent=11 // pred_fallthru
          _
        // Predicated region
        $region37: #{tpu_custom_call.1} parent=11 // pred_check
          %p523 = pneg %p243
        $region38: #{tpu_custom_call.1} parent=11 // pred_check_branch
          %525 = sbr.rel (%p523) target = $region40
        $region39: #{tpu_custom_call.1} parent=11 // pred_region
          %s527 = ssub.s32 256, 256
          %528 = vsyncadd [#allocation11], %s527
          %s529 = sshll.u32 [#allocation10], 4
          %s530 = int_to_ptr.vmem [resolvable:$true] %s529
          %535 = dma.hbm_to_vmem [thread:$0]  %s8, 256, %s530, [#allocation11], 64, 64, 4
        $region40: #{tpu_custom_call.1} parent=11 // pred_fallthru
          _
        // Predicated region
        $region41: #{tpu_custom_call.1} parent=11 // pred_check
          %p536 = pneg %p264
        $region42: #{tpu_custom_call.1} parent=11 // pred_check_branch
          %538 = sbr.rel (%p536) target = $region44
        $region43: #{tpu_custom_call.1} parent=11 // pred_region
          _
        $region44: #{tpu_custom_call.1} parent=11 // pred_fallthru
          _
        // Predicated region
        $region45: #{tpu_custom_call.1} parent=11 // pred_check
          %p539 = pneg %p285
        $region46: #{tpu_custom_call.1} parent=11 // pred_check_branch
          %541 = sbr.rel (%p539) target = $region48
        $region47: #{tpu_custom_call.1} parent=11 // pred_region
          _
        $region48: #{tpu_custom_call.1} parent=11 // pred_fallthru
          _
        // Predicated region
        $region49: #{tpu_custom_call.1} parent=11 // pred_check
          %p542 = pneg %p306
        $region50: #{tpu_custom_call.1} parent=11 // pred_check_branch
          %544 = sbr.rel (%p542) target = $region52
        $region51: #{tpu_custom_call.1} parent=11 // pred_region
          _
        $region52: #{tpu_custom_call.1} parent=11 // pred_fallthru
          _
        // Predicated region
        $region53: #{tpu_custom_call.1} parent=11 // pred_check
          %p545 = pneg %p327
        $region54: #{tpu_custom_call.1} parent=11 // pred_check_branch
          %547 = sbr.rel (%p545) target = $region56
        $region55: #{tpu_custom_call.1} parent=11 // pred_region
          %s549 = ssub.s32 256, 256
          %550 = vsyncadd [#allocation11], %s549
          %s551 = sshll.u32 [#allocation12], 4
          %s552 = int_to_ptr.vmem [resolvable:$true] %s551
          %557 = dma.hbm_to_vmem [thread:$0]  %s12, 256, %s552, [#allocation11], 64, 64, 4
        $region56: #{tpu_custom_call.1} parent=11 // pred_fallthru
          _
        // Predicated region
        $region57: #{tpu_custom_call.1} parent=11 // pred_check
          %p558 = pneg %p348
        $region58: #{tpu_custom_call.1} parent=11 // pred_check_branch
          %560 = sbr.rel (%p558) target = $region60
        $region59: #{tpu_custom_call.1} parent=11 // pred_region
          _
        $region60: #{tpu_custom_call.1} parent=11 // pred_fallthru
          _
        // Predicated region
        $region61: #{tpu_custom_call.1} parent=11 // pred_check
          %p561 = pneg %p369
        $region62: #{tpu_custom_call.1} parent=11 // pred_check_branch
          %563 = sbr.rel (%p561) target = $region64
        $region63: #{tpu_custom_call.1} parent=11 // pred_region
          _
        $region64: #{tpu_custom_call.1} parent=11 // pred_fallthru
          _
        // Predicated region
        $region65: #{tpu_custom_call.1} parent=11 // pred_check
          %p564 = pneg %p390
        $region66: #{tpu_custom_call.1} parent=11 // pred_check_branch
          %566 = sbr.rel (%p564) target = $region68
        $region67: #{tpu_custom_call.1} parent=11 // pred_region
          _
        $region68: #{tpu_custom_call.1} parent=11 // pred_fallthru
          _
        // Predicated region
        $region69: #{tpu_custom_call.1} parent=11 // pred_check
          %p567 = pneg %p411
        $region70: #{tpu_custom_call.1} parent=11 // pred_check_branch
          %569 = sbr.rel (%p567) target = $region72
        $region71: #{tpu_custom_call.1} parent=11 // pred_region
          _
        $region72: #{tpu_custom_call.1} parent=11 // pred_fallthru
          _
        // Predicated region
        $region73: #{tpu_custom_call.1} parent=11 // pred_check
          %p570 = pneg %p432
        $region74: #{tpu_custom_call.1} parent=11 // pred_check_branch
          %572 = sbr.rel (%p570) target = $region76
        $region75: #{tpu_custom_call.1} parent=11 // pred_region
          _
        $region76: #{tpu_custom_call.1} parent=11 // pred_fallthru
          _
      $region12: #{tpu_custom_call.1} parent=5 // pred_fallthru
        _
      %p573 = scmp.lt.s32.totalorder %s30, 4
      // Predicated region
      $region77: #{tpu_custom_call.1} parent=5 // pred_check
        %p574 = pneg %p573
      $region78: #{tpu_custom_call.1} parent=5 // pred_check_branch
        %576 = sbr.rel (%p574) target = $region80
      $region79: #{tpu_custom_call.1} parent=5 // pred_region
        // Predicated region
        $region81: #{tpu_custom_call.1} parent=79 // pred_check
          %p577 = pneg %p64
        $region82: #{tpu_custom_call.1} parent=79 // pred_check_branch
          %579 = sbr.rel (%p577) target = $region84
        $region83: #{tpu_custom_call.1} parent=79 // pred_region
          %p580 = scmp.lt.s32.totalorder %s37, 1
          %s581 = scalar_select %p580, %s37, 1
          %p582 = scmp.lt.s32.totalorder %s38, 1
          %s583 = scalar_select %p582, %s38, 1
          %s584 = smul.addr %s581, 2
          %s585 = sadd.s32 %s583, %s584
          %s586 = smul.addr %s585, 8
          %s587 = scalar_lea.vmem %s0, %s586
        $region84: #{tpu_custom_call.1} parent=79 // pred_fallthru
          _
        // Predicated region
        $region85: #{tpu_custom_call.1} parent=79 // pred_check
          %p588 = pneg %p90
        $region86: #{tpu_custom_call.1} parent=79 // pred_check_branch
          %590 = sbr.rel (%p588) target = $region88
        $region87: #{tpu_custom_call.1} parent=79 // pred_region
          %p591 = scmp.lt.s32.totalorder %s37, 1
          %s592 = scalar_select %p591, %s37, 1
          %s593 = smul.addr %s592, 2
          %s594 = smul.addr %s593, 4
          %s595 = scalar_lea.vmem %s1, %s594
        $region88: #{tpu_custom_call.1} parent=79 // pred_fallthru
          _
      $region80: #{tpu_custom_call.1} parent=5 // pred_fallthru
        _
      %p596 = scmp.le.s32.totalorder 1, %s30
      %p597 = scmp.lt.s32.totalorder %s30, 5
      %p598 = pnand %p596, %p597
      %p599 = pneg %p598
      // Predicated region
      $region89: #{tpu_custom_call.1} parent=5 // pred_check
        _
      $region90: #{tpu_custom_call.1} parent=5 // pred_check_branch
        %601 = sbr.rel (%p598) target = $region92
      $region91: #{tpu_custom_call.1} parent=5 // pred_region
        %s602 = ssub.s32 %s30, 1
        // Predicated region
        $region93: #{tpu_custom_call.1} parent=91 // pred_check
          %p603 = pneg %p117
        $region94: #{tpu_custom_call.1} parent=91 // pred_check_branch
          %605 = sbr.rel (%p603) target = $region96
        $region95: #{tpu_custom_call.1} parent=91 // pred_region
          %606 = dma.done [#allocation5], 256
        $region96: #{tpu_custom_call.1} parent=91 // pred_fallthru
          _
        // Predicated region
        $region97: #{tpu_custom_call.1} parent=91 // pred_check
          %p607 = pneg %p159
        $region98: #{tpu_custom_call.1} parent=91 // pred_check_branch
          %609 = sbr.rel (%p607) target = $region100
        $region99: #{tpu_custom_call.1} parent=91 // pred_region
          %610 = dma.done [#allocation8], 256
        $region100: #{tpu_custom_call.1} parent=91 // pred_fallthru
          _
        // Predicated region
        $region101: #{tpu_custom_call.1} parent=91 // pred_check
          %p611 = pneg %p201
        $region102: #{tpu_custom_call.1} parent=91 // pred_check_branch
          %613 = sbr.rel (%p611) target = $region104
        $region103: #{tpu_custom_call.1} parent=91 // pred_region
          %614 = dma.done [#allocation8], 256
        $region104: #{tpu_custom_call.1} parent=91 // pred_fallthru
          _
        // Predicated region
        $region105: #{tpu_custom_call.1} parent=91 // pred_check
          %p615 = pneg %p243
        $region106: #{tpu_custom_call.1} parent=91 // pred_check_branch
          %617 = sbr.rel (%p615) target = $region108
        $region107: #{tpu_custom_call.1} parent=91 // pred_region
          %618 = dma.done [#allocation11], 256
        $region108: #{tpu_custom_call.1} parent=91 // pred_fallthru
          _
        // Predicated region
        $region109: #{tpu_custom_call.1} parent=91 // pred_check
          %p619 = pneg %p327
        $region110: #{tpu_custom_call.1} parent=91 // pred_check_branch
          %621 = sbr.rel (%p619) target = $region112
        $region111: #{tpu_custom_call.1} parent=91 // pred_region
          %622 = dma.done [#allocation11], 256
        $region112: #{tpu_custom_call.1} parent=91 // pred_fallthru
          _
        %p623 = scmp.lt.s32.totalorder %s39, 1
        %s624 = scalar_select %p623, %s39, 1
        %p625 = scmp.lt.s32.totalorder %s40, 1
        %s626 = scalar_select %p625, %s40, 1
        %s627 = smul.addr %s624, 2
        %s628 = sadd.s32 %s626, %s627
        %s629 = smul.addr %s628, 8
        %s630 = scalar_lea.vmem %s0, %s629
        %p631 = pneg %p70
        %p632 = pneg %p67
        %p633 = scmp.lt.s32.totalorder %s39, 1
        %s634 = scalar_select %p633, %s39, 1
        %s635 = smul.addr %s634, 2
        %s636 = smul.addr %s635, 4
        %s637 = scalar_lea.vmem %s1, %s636
        %p638 = pneg %p96
        %p639 = pneg %p93
        %p640 = pneg %p117
        %p641 = pneg %p114
        %p642 = pneg %p138
        %p643 = pneg %p135
        %p644 = pneg %p159
        %p645 = pneg %p156
        %p646 = pneg %p180
        %p647 = pneg %p177
        %p648 = pneg %p201
        %p649 = pneg %p198
        %p650 = pneg %p222
        %p651 = pneg %p219
        %p652 = pneg %p243
        %p653 = pneg %p240
        %p654 = pneg %p264
        %p655 = pneg %p261
        %p656 = pneg %p285
        %p657 = pneg %p282
        %p658 = pneg %p306
        %p659 = pneg %p303
        %p660 = pneg %p327
        %p661 = pneg %p324
        %p662 = pneg %p348
        %p663 = pneg %p345
        %p664 = pneg %p369
        %p665 = pneg %p366
        %p666 = pneg %p390
        %p667 = pneg %p387
        %p668 = pneg %p411
        %p669 = pneg %p408
        %p670 = pneg %p432
        %p671 = pneg %p429
        %p672 = pneg %p460
        %p673 = pneg %p457
        %s674 = sand.u32 %s447, 1
        %s675 = scalar_lea.sflag [#allocation6], %s674
        %s676 = sand.u32 %s447, 1
        %s677 = smul.addr %s676, 8
        %s678 = scalar_lea.vmem [#allocation13], %s677
        %p679 = scmp.lt.s32.totalorder %s39, 1
        %s680 = scalar_select %p679, %s39, 1
        %p681 = scmp.lt.s32.totalorder %s40, 1
        %s682 = scalar_select %p681, %s40, 1
        %s683 = smul.addr %s680, 2
        %s684 = sadd.s32 %s682, %s683
        %s685 = smul.addr %s684, 8
        %s686 = scalar_lea.vmem %s0, %s685
        %p687 = scmp.lt.s32.totalorder %s39, 1
        %s688 = scalar_select %p687, %s39, 1
        %s689 = smul.addr %s688, 2
        %s690 = smul.addr %s689, 4
        %s691 = scalar_lea.vmem %s1, %s690
        %p693 = scmp.eq.s32.totalorder %s40, 0
        // Predicated region
        $region113: #{tpu_custom_call.1} parent=91 // pred_check
          %p694 = pneg %p693
        $region114: #{tpu_custom_call.1} parent=91 // pred_check_branch
          %696 = sbr.rel (%p694) target = $region116
        $region115: #{tpu_custom_call.1} parent=91 // pred_region
          %v697 = vld [vmem:[%s691] sm:$0xf]
          %v698 = vld [vmem:[%s691 + $0x4] sm:$0xf]
          %v699 = vld [vmem:[#allocation7] sm:$0xf]
          %v700 = vld [vmem:[#allocation7 + $0x4] sm:$0xf]
          %v701 = vld [vmem:[#allocation7 + $0x8] sm:$0xf]
          %v702 = vld [vmem:[#allocation7 + $0xc] sm:$0xf]
          %v703 = vld [vmem:[%s5] sm:$0x1]
          %v705 = vlaneseq
          %v706 = vshrl.u32 %v705, 7
          %v707 = vsub.s32 0, %v706
          %v708 = vrot.slane %v703, %v707
          %v712 = vunpack.c.l.b16 %v697
          %v713 = vunpack.c.l.b16 %v698
          %v714 = vpack.c.b16 %v713, %v712
          %v719 = vunpack.c.l.b16 %v699
          %v720 = vunpack.c.l.b16 %v700
          %v721 = vunpack.c.l.b16 %v701
          %v722 = vunpack.c.l.b16 %v702
          %v723 = vpack.c.b16 %v720, %v719
          %v724 = vpack.c.b16 %v722, %v721
          %vm727 = vcmask 261120
          %v729 = vsel %vm727, %v714, 0
          %731 = vmatprep.subr.bf16.mxu0 0
          %732 = vmatpush1.bf16.msra.mxu0 0
          %733 = vmatprep.subr.bf16.mxu0 0
          %734 = vmatpush1.bf16.msra.mxu0 0
          %735 = vmatprep.subr.bf16.mxu0 0
          %736 = vmatpush1.bf16.msra.mxu0 0
          %737 = vmatprep.subr.bf16.mxu0 0
          %738 = vmatpush1.bf16.msra.mxu0 0
          %739 = vmatprep.subr.bf16.mxu0 0
          %740 = vmatpush1.bf16.msra.mxu0 0
          %741 = vmatprep.subr.bf16.mxu0 0
          %742 = vmatpush1.bf16.msra.mxu0 0
          %743 = vmatprep.subr.bf16.mxu0 0
          %744 = vmatpush1.bf16.msra.mxu0 %v724
          %745 = vmatprep.subr.bf16.mxu0 0
          %746 = vmatpush1.bf16.msra.mxu0 %v723
          %747 = vmatprep.subr.bf16.mxu0 0
          %748 = vmatpush2.bf16.msra.mxu0 0
          %749 = vmatprep.subr.bf16.mxu0 0
          %750 = vmatpush2.bf16.msra.mxu0 0
          %751 = vmatprep.subr.bf16.mxu0 0
          %752 = vmatpush2.bf16.msra.mxu0 0
          %753 = vmatprep.subr.bf16.mxu0 0
          %754 = vmatpush2.bf16.msra.mxu0 0
          %755 = vmatprep.subr.bf16.mxu0 0
          %756 = vmatpush2.bf16.msra.mxu0 0
          %757 = vmatprep.subr.bf16.mxu0 0
          %758 = vmatpush2.bf16.msra.mxu0 0
          %759 = vmatprep.subr.bf16.mxu0 0
          %760 = vmatpush2.bf16.msra.mxu0 0
          %761 = vmatprep.subr.bf16.mxu0 0
          %762 = vmatpush2.bf16.msra.mxu0 0
          %763 = vmatprep.mubr.bf16.mxu0 0
          %764 = vmatmul.mubr.bf16.gmra.mxu0 %v729
          %v765 = vpop.f32.mrf.mxu0
          %v766 = vadd.f32 %v708, %v765
          %v767 = vpop.f32.mrf.mxu0
          %v768 = vpop.f32.mrf.mxu0
          %v769 = vadd.f32 %v708, %v768
          %v770 = vpop.f32.mrf.mxu0
          %771 = vdwg.mxu0
          %v772 = vld [vmem:[#allocation9] sm:$0xf]
          %v773 = vld [vmem:[#allocation9 + $0x4] sm:$0xf]
          %v774 = vld [vmem:[#allocation9 + $0x8] sm:$0xf]
          %v775 = vld [vmem:[#allocation9 + $0xc] sm:$0xf]
          %v776 = vld [vmem:[%s7] sm:$0x1]
          %v778 = vlaneseq
          %v779 = vshrl.u32 %v778, 7
          %v780 = vsub.s32 0, %v779
          %v781 = vrot.slane %v776, %v780
          %v787 = vunpack.c.l.b16 %v772
          %v788 = vunpack.c.l.b16 %v773
          %v789 = vunpack.c.l.b16 %v774
          %v790 = vunpack.c.l.b16 %v775
          %v791 = vpack.c.b16 %v788, %v787
          %v792 = vpack.c.b16 %v790, %v789
          %795 = vmatprep.subr.bf16.mxu0 0
          %796 = vmatpush1.bf16.msra.mxu0 0
          %797 = vmatprep.subr.bf16.mxu0 0
          %798 = vmatpush1.bf16.msra.mxu0 0
          %799 = vmatprep.subr.bf16.mxu0 0
          %800 = vmatpush1.bf16.msra.mxu0 0
          %801 = vmatprep.subr.bf16.mxu0 0
          %802 = vmatpush1.bf16.msra.mxu0 0
          %803 = vmatprep.subr.bf16.mxu0 0
          %804 = vmatpush1.bf16.msra.mxu0 0
          %805 = vmatprep.subr.bf16.mxu0 0
          %806 = vmatpush1.bf16.msra.mxu0 0
          %807 = vmatprep.subr.bf16.mxu0 0
          %808 = vmatpush1.bf16.msra.mxu0 %v792
          %809 = vmatprep.subr.bf16.mxu0 0
          %810 = vmatpush1.bf16.msra.mxu0 %v791
          %811 = vmatprep.subr.bf16.mxu0 0
          %812 = vmatpush2.bf16.msra.mxu0 0
          %813 = vmatprep.subr.bf16.mxu0 0
          %814 = vmatpush2.bf16.msra.mxu0 0
          %815 = vmatprep.subr.bf16.mxu0 0
          %816 = vmatpush2.bf16.msra.mxu0 0
          %817 = vmatprep.subr.bf16.mxu0 0
          %818 = vmatpush2.bf16.msra.mxu0 0
          %819 = vmatprep.subr.bf16.mxu0 0
          %820 = vmatpush2.bf16.msra.mxu0 0
          %821 = vmatprep.subr.bf16.mxu0 0
          %822 = vmatpush2.bf16.msra.mxu0 0
          %823 = vmatprep.subr.bf16.mxu0 0
          %824 = vmatpush2.bf16.msra.mxu0 0
          %825 = vmatprep.subr.bf16.mxu0 0
          %826 = vmatpush2.bf16.msra.mxu0 0
          %827 = vmatprep.mubr.bf16.mxu0 0
          %828 = vmatmul.mubr.bf16.gmra.mxu0 %v729
          %v829 = vpop.f32.mrf.mxu0
          %v830 = vadd.f32 %v781, %v829
          %v831 = vpop.f32.mrf.mxu0
          %v832 = vpop.f32.mrf.mxu0
          %v833 = vadd.f32 %v781, %v832
          %v834 = vpop.f32.mrf.mxu0
          %835 = vdwg.mxu0
          %v836 = vpack.c.bf16 %v769, %v766
          %v838 = vunpack.c.l.b16 %v836
          %v839 = vunpack.c.h.b16 %v836
          %v840 = vpack.c.b16 %v838, %v838
          %v841 = vpack.c.b16 %v839, %v839
          %vm844 = vcmask 60416
          %845 = vst.msk [vmem:[#allocation2] sm:$0xf] %vm844, %v840
          %846 = vst.msk [vmem:[#allocation2 + $0x4] sm:$0xf] %vm844, %v841
          %v847 = vpack.c.bf16 %v833, %v830
          %v849 = vunpack.c.l.b16 %v847
          %v850 = vunpack.c.h.b16 %v847
          %v851 = vpack.c.b16 %v849, %v849
          %v852 = vpack.c.b16 %v850, %v850
          %855 = vst.msk [vmem:[#allocation3] sm:$0xf] %vm844, %v851
          %856 = vst.msk [vmem:[#allocation3 + $0x4] sm:$0xf] %vm844, %v852
          %857 = vrot.lane.b32.xlu0 %v840, 120
          %v858 = vpop.permute.xlu0 %857
          %859 = vrot.lane.b32.xlu0 %v841, 120
          %v860 = vpop.permute.xlu0 %859
          %s863 = scalar_lea.vmem [#allocation2], 8
          %864 = vst.msk [vmem:[%s863] sm:$0xf] %vm844, %v858
          %865 = vst.msk [vmem:[%s863 + $0x4] sm:$0xf] %vm844, %v860
          %866 = vrot.lane.b32.xlu0 %v851, 120
          %v867 = vpop.permute.xlu0 %866
          %868 = vrot.lane.b32.xlu0 %v852, 120
          %v869 = vpop.permute.xlu0 %868
          %s872 = scalar_lea.vmem [#allocation3], 8
          %873 = vst.msk [vmem:[%s872] sm:$0xf] %vm844, %v867
          %874 = vst.msk [vmem:[%s872 + $0x4] sm:$0xf] %vm844, %v869
          %875 = vrot.lane.b32.xlu0 %v840, 112
          %v876 = vpop.permute.xlu0 %875
          %877 = vrot.lane.b32.xlu0 %v841, 112
          %v878 = vpop.permute.xlu0 %877
          %s881 = scalar_lea.vmem [#allocation2], 16
          %882 = vst.msk [vmem:[%s881] sm:$0xf] %vm844, %v876
          %883 = vst.msk [vmem:[%s881 + $0x4] sm:$0xf] %vm844, %v878
          %884 = vrot.lane.b32.xlu0 %v851, 112
          %v885 = vpop.permute.xlu0 %884
          %886 = vrot.lane.b32.xlu0 %v852, 112
          %v887 = vpop.permute.xlu0 %886
          %s890 = scalar_lea.vmem [#allocation3], 16
          %891 = vst.msk [vmem:[%s890] sm:$0xf] %vm844, %v885
          %892 = vst.msk [vmem:[%s890 + $0x4] sm:$0xf] %vm844, %v887
          %893 = vrot.lane.b32.xlu0 %v840, 104
          %v894 = vpop.permute.xlu0 %893
          %895 = vrot.lane.b32.xlu0 %v841, 104
          %v896 = vpop.permute.xlu0 %895
          %s899 = scalar_lea.vmem [#allocation2], 24
          %900 = vst.msk [vmem:[%s899] sm:$0xf] %vm844, %v894
          %901 = vst.msk [vmem:[%s899 + $0x4] sm:$0xf] %vm844, %v896
          %902 = vrot.lane.b32.xlu0 %v851, 104
          %v903 = vpop.permute.xlu0 %902
          %904 = vrot.lane.b32.xlu0 %v852, 104
          %v905 = vpop.permute.xlu0 %904
          %s908 = scalar_lea.vmem [#allocation3], 24
          %909 = vst.msk [vmem:[%s908] sm:$0xf] %vm844, %v903
          %910 = vst.msk [vmem:[%s908 + $0x4] sm:$0xf] %vm844, %v905
        $region116: #{tpu_custom_call.1} parent=91 // pred_fallthru
          _
        %v911 = vld [vmem:[%s686] sm:$0xff]
        %v912 = vpack.c.bf16 %v911, %v911
        %v913 = vld [vmem:[#allocation4] sm:$0xf]
        %v914 = vld [vmem:[#allocation4 + $0x4] sm:$0xf]
        %v915 = vld [vmem:[#allocation4 + $0x8] sm:$0xf]
        %v916 = vld [vmem:[#allocation4 + $0xc] sm:$0xf]
        %v917 = vld [vmem:[%s3] sm:$0x1]
        %v919 = vlaneseq
        %v920 = vshrl.u32 %v919, 7
        %v921 = vsub.s32 0, %v920
        %v922 = vrot.slane %v917, %v921
        %v928 = vunpack.c.l.b16 %v913
        %v929 = vunpack.c.l.b16 %v914
        %v930 = vunpack.c.l.b16 %v915
        %v931 = vunpack.c.l.b16 %v916
        %v932 = vpack.c.b16 %v929, %v928
        %v933 = vpack.c.b16 %v931, %v930
        %vm936 = vcmask 261120
        %v938 = vsel %vm936, %v912, 0
        %940 = vmatprep.subr.bf16.mxu0 0
        %941 = vmatpush1.bf16.msra.mxu0 0
        %942 = vmatprep.subr.bf16.mxu0 0
        %943 = vmatpush1.bf16.msra.mxu0 0
        %944 = vmatprep.subr.bf16.mxu0 0
        %945 = vmatpush1.bf16.msra.mxu0 0
        %946 = vmatprep.subr.bf16.mxu0 0
        %947 = vmatpush1.bf16.msra.mxu0 0
        %948 = vmatprep.subr.bf16.mxu0 0
        %949 = vmatpush1.bf16.msra.mxu0 0
        %950 = vmatprep.subr.bf16.mxu0 0
        %951 = vmatpush1.bf16.msra.mxu0 0
        %952 = vmatprep.subr.bf16.mxu0 0
        %953 = vmatpush1.bf16.msra.mxu0 %v933
        %954 = vmatprep.subr.bf16.mxu0 0
        %955 = vmatpush1.bf16.msra.mxu0 %v932
        %956 = vmatprep.subr.bf16.mxu0 0
        %957 = vmatpush2.bf16.msra.mxu0 0
        %958 = vmatprep.subr.bf16.mxu0 0
        %959 = vmatpush2.bf16.msra.mxu0 0
        %960 = vmatprep.subr.bf16.mxu0 0
        %961 = vmatpush2.bf16.msra.mxu0 0
        %962 = vmatprep.subr.bf16.mxu0 0
        %963 = vmatpush2.bf16.msra.mxu0 0
        %964 = vmatprep.subr.bf16.mxu0 0
        %965 = vmatpush2.bf16.msra.mxu0 0
        %966 = vmatprep.subr.bf16.mxu0 0
        %967 = vmatpush2.bf16.msra.mxu0 0
        %968 = vmatprep.subr.bf16.mxu0 0
        %969 = vmatpush2.bf16.msra.mxu0 0
        %970 = vmatprep.subr.bf16.mxu0 0
        %971 = vmatpush2.bf16.msra.mxu0 0
        %972 = vmatprep.mubr.bf16.mxu0 0
        %973 = vmatmul.mubr.bf16.gmra.mxu0 %v938
        %v974 = vpop.f32.mrf.mxu0
        %v975 = vadd.f32 %v922, %v974
        %v976 = vpop.f32.mrf.mxu0
        %v977 = vpop.f32.mrf.mxu0
        %v978 = vpop.f32.mrf.mxu0
        %979 = vdwg.mxu0
        %v980 = vmul.f32 %v975, 0.35355338
        %v981 = vld [vmem:[%s9] sm:$0x1]
        %v983 = vlaneseq
        %v984 = vshrl.u32 %v983, 7
        %v985 = vsub.s32 0, %v984
        %v986 = vrot.slane %v981, %v985
        %v988 = vadd.f32 %v986, 0.0
        %v989 = vpack.c.bf16 %v980, %v980
        %v990 = vld [vmem:[#allocation2] sm:$0xf]
        %v991 = vld [vmem:[#allocation2 + $0x4] sm:$0xf]
        %v992 = vld [vmem:[#allocation3] sm:$0xf]
        %v993 = vld [vmem:[#allocation3 + $0x4] sm:$0xf]
        %v996 = vunpack.c.l.b16 %v990
        %v997 = vunpack.c.l.b16 %v991
        %v998 = vpack.c.b16 %v997, %v996
        %vm999 = vcmask 64512
        %v1001 = vsel %vm999, %v989, 0
        %v1004 = vsel %vm999, %v998, 0
        %1006 = vmatprep.subr.bf16.mxu0 0
        %1007 = vmatpush1.bf16.xpose.msra.mxu0 0
        %1008 = vmatprep.subr.bf16.mxu0 0
        %1009 = vmatpush1.bf16.xpose.msra.mxu0 0
        %1010 = vmatprep.subr.bf16.mxu0 0
        %1011 = vmatpush1.bf16.xpose.msra.mxu0 0
        %1012 = vmatprep.subr.bf16.mxu0 0
        %1013 = vmatpush1.bf16.xpose.msra.mxu0 0
        %1014 = vmatprep.subr.bf16.mxu0 0
        %1015 = vmatpush1.bf16.xpose.msra.mxu0 0
        %1016 = vmatprep.subr.bf16.mxu0 0
        %1017 = vmatpush1.bf16.xpose.msra.mxu0 0
        %1018 = vmatprep.subr.bf16.mxu0 0
        %1019 = vmatpush1.bf16.xpose.msra.mxu0 0
        %1020 = vmatprep.subr.bf16.mxu0 0
        %1021 = vmatpush1.bf16.xpose.msra.mxu0 %v1004
        %1022 = vmatprep.subr.bf16.mxu0 0
        %1023 = vmatpush2.bf16.xpose.msra.mxu0 0
        %1024 = vmatprep.subr.bf16.mxu0 0
        %1025 = vmatpush2.bf16.xpose.msra.mxu0 0
        %1026 = vmatprep.subr.bf16.mxu0 0
        %1027 = vmatpush2.bf16.xpose.msra.mxu0 0
        %1028 = vmatprep.subr.bf16.mxu0 0
        %1029 = vmatpush2.bf16.xpose.msra.mxu0 0
        %1030 = vmatprep.subr.bf16.mxu0 0
        %1031 = vmatpush2.bf16.xpose.msra.mxu0 0
        %1032 = vmatprep.subr.bf16.mxu0 0
        %1033 = vmatpush2.bf16.xpose.msra.mxu0 0
        %1034 = vmatprep.subr.bf16.mxu0 0
        %1035 = vmatpush2.bf16.xpose.msra.mxu0 0
        %1036 = vmatprep.subr.bf16.mxu0 0
        %1037 = vmatpush2.bf16.xpose.msra.mxu0 0
        %1038 = vmatprep.mubr.bf16.mxu0 0
        %1039 = vmatmul.mubr.bf16.gmra.mxu0 %v1001
        %v1040 = vpop.f32.mrf.mxu0
        %v1041 = vadd.f32 0.0, %v1040
        %v1042 = vpop.f32.mrf.mxu0
        %v1043 = vpop.f32.mrf.mxu0
        %v1044 = vpop.f32.mrf.mxu0
        %1045 = vdwg.mxu0
        %vm1046 = vcmask 130048
        %v1047 = vsel %vm1046, %v1041, -inf
        %1048 = vmax.xlane.f32.xlu0 %v1047
        %v1049 = vpop.xlane.xlu0 %1048
        %v1050 = vsub.f32 %v1041, %v1049
        %v1051 = vmul.f32 %v1050, 1.442695
        %v1052 = vpow.pop %v1051
        %v1053 = vsel %vm1046, %v1052, 0.0
        %1054 = vadd.xlane.f32.xlu0 %v1053
        %v1055 = vpop.xlane.xlu0 %1054
        %v1056 = vrcp.pop %v1055
        %v1057 = vmul.f32 %v1052, %v1056
        %v1058 = vpack.c.bf16 %v1057, %v1057
        %v1061 = vunpack.c.l.b16 %v992
        %v1062 = vunpack.c.l.b16 %v993
        %v1063 = vpack.c.b16 %v1062, %v1061
        %v1066 = vsel %vm1046, %v1058, 0
        %1068 = vmatprep.subr.bf16.mxu0 0
        %1069 = vmatpush1.bf16.msra.mxu0 0
        %1070 = vmatprep.subr.bf16.mxu0 0
        %1071 = vmatpush1.bf16.msra.mxu0 0
        %1072 = vmatprep.subr.bf16.mxu0 0
        %1073 = vmatpush1.bf16.msra.mxu0 0
        %1074 = vmatprep.subr.bf16.mxu0 0
        %1075 = vmatpush1.bf16.msra.mxu0 0
        %1076 = vmatprep.subr.bf16.mxu0 0
        %1077 = vmatpush1.bf16.msra.mxu0 0
        %1078 = vmatprep.subr.bf16.mxu0 0
        %1079 = vmatpush1.bf16.msra.mxu0 0
        %1080 = vmatprep.subr.bf16.mxu0 0
        %1081 = vmatpush1.bf16.msra.mxu0 0
        %1082 = vmatprep.subr.bf16.mxu0 0
        %1083 = vmatpush1.bf16.msra.mxu0 %v1063
        %1084 = vmatprep.subr.bf16.mxu0 0
        %1085 = vmatpush2.bf16.msra.mxu0 0
        %1086 = vmatprep.subr.bf16.mxu0 0
        %1087 = vmatpush2.bf16.msra.mxu0 0
        %1088 = vmatprep.subr.bf16.mxu0 0
        %1089 = vmatpush2.bf16.msra.mxu0 0
        %1090 = vmatprep.subr.bf16.mxu0 0
        %1091 = vmatpush2.bf16.msra.mxu0 0
        %1092 = vmatprep.subr.bf16.mxu0 0
        %1093 = vmatpush2.bf16.msra.mxu0 0
        %1094 = vmatprep.subr.bf16.mxu0 0
        %1095 = vmatpush2.bf16.msra.mxu0 0
        %1096 = vmatprep.subr.bf16.mxu0 0
        %1097 = vmatpush2.bf16.msra.mxu0 0
        %1098 = vmatprep.subr.bf16.mxu0 0
        %1099 = vmatpush2.bf16.msra.mxu0 0
        %1100 = vmatprep.mubr.bf16.mxu0 0
        %1101 = vmatmul.mubr.bf16.gmra.mxu0 %v1066
        %v1102 = vpop.f32.mrf.mxu0
        %v1103 = vadd.f32 0.0, %v1102
        %v1104 = vpop.f32.mrf.mxu0
        %v1105 = vpop.f32.mrf.mxu0
        %v1106 = vpop.f32.mrf.mxu0
        %1107 = vdwg.mxu0
        %v1108 = vpack.c.bf16 %v1103, %v1103
        %v1109 = vld [vmem:[#allocation10] sm:$0xf]
        %v1111 = vsel %vm999, %v1108, 0
        %vm1113 = vcmask 1043456
        %v1115 = vsel %vm1113, %v1109, 0
        %1117 = vmatprep.subr.bf16.mxu0 0
        %1118 = vmatpush1.bf16.msra.mxu0 0
        %1119 = vmatprep.subr.bf16.mxu0 0
        %1120 = vmatpush1.bf16.msra.mxu0 0
        %1121 = vmatprep.subr.bf16.mxu0 0
        %1122 = vmatpush1.bf16.msra.mxu0 0
        %1123 = vmatprep.subr.bf16.mxu0 0
        %1124 = vmatpush1.bf16.msra.mxu0 0
        %1125 = vmatprep.subr.bf16.mxu0 0
        %1126 = vmatpush1.bf16.msra.mxu0 0
        %1127 = vmatprep.subr.bf16.mxu0 0
        %1128 = vmatpush1.bf16.msra.mxu0 0
        %1129 = vmatprep.subr.bf16.mxu0 0
        %1130 = vmatpush1.bf16.msra.mxu0 0
        %1131 = vmatprep.subr.bf16.mxu0 0
        %1132 = vmatpush1.bf16.msra.mxu0 %v1115
        %1133 = vmatprep.subr.bf16.mxu0 0
        %1134 = vmatpush2.bf16.msra.mxu0 0
        %1135 = vmatprep.subr.bf16.mxu0 0
        %1136 = vmatpush2.bf16.msra.mxu0 0
        %1137 = vmatprep.subr.bf16.mxu0 0
        %1138 = vmatpush2.bf16.msra.mxu0 0
        %1139 = vmatprep.subr.bf16.mxu0 0
        %1140 = vmatpush2.bf16.msra.mxu0 0
        %1141 = vmatprep.subr.bf16.mxu0 0
        %1142 = vmatpush2.bf16.msra.mxu0 0
        %1143 = vmatprep.subr.bf16.mxu0 0
        %1144 = vmatpush2.bf16.msra.mxu0 0
        %1145 = vmatprep.subr.bf16.mxu0 0
        %1146 = vmatpush2.bf16.msra.mxu0 0
        %1147 = vmatprep.subr.bf16.mxu0 0
        %1148 = vmatpush2.bf16.msra.mxu0 0
        %1149 = vmatprep.mubr.bf16.mxu0 0
        %1150 = vmatmul.mubr.bf16.gmra.mxu0 %v1111
        %v1151 = vpop.f32.mrf.mxu0
        %v1152 = vadd.f32 0.0, %v1151
        %v1153 = vpop.f32.mrf.mxu0
        %v1154 = vpop.f32.mrf.mxu0
        %v1155 = vpop.f32.mrf.mxu0
        %1156 = vdwg.mxu0
        %v1157 = vadd.f32 %v988, %v1152
        %s1158 = scalar_lea.vmem [#allocation2], 8
        %v1159 = vld [vmem:[%s1158] sm:$0xf]
        %v1160 = vld [vmem:[%s1158 + $0x4] sm:$0xf]
        %s1161 = scalar_lea.vmem [#allocation3], 8
        %v1162 = vld [vmem:[%s1161] sm:$0xf]
        %v1163 = vld [vmem:[%s1161 + $0x4] sm:$0xf]
        %1165 = vrot.lane.b32.xlu0 %v989, 120
        %v1166 = vpop.permute.xlu0 %1165
        %v1169 = vunpack.c.l.b16 %v1159
        %v1170 = vunpack.c.l.b16 %v1160
        %v1171 = vpack.c.b16 %v1170, %v1169
        %v1173 = vsel %vm999, %v1166, 0
        %v1176 = vsel %vm999, %v1171, 0
        %1178 = vmatprep.subr.bf16.mxu0 0
        %1179 = vmatpush1.bf16.xpose.msra.mxu0 0
        %1180 = vmatprep.subr.bf16.mxu0 0
        %1181 = vmatpush1.bf16.xpose.msra.mxu0 0
        %1182 = vmatprep.subr.bf16.mxu0 0
        %1183 = vmatpush1.bf16.xpose.msra.mxu0 0
        %1184 = vmatprep.subr.bf16.mxu0 0
        %1185 = vmatpush1.bf16.xpose.msra.mxu0 0
        %1186 = vmatprep.subr.bf16.mxu0 0
        %1187 = vmatpush1.bf16.xpose.msra.mxu0 0
        %1188 = vmatprep.subr.bf16.mxu0 0
        %1189 = vmatpush1.bf16.xpose.msra.mxu0 0
        %1190 = vmatprep.subr.bf16.mxu0 0
        %1191 = vmatpush1.bf16.xpose.msra.mxu0 0
        %1192 = vmatprep.subr.bf16.mxu0 0
        %1193 = vmatpush1.bf16.xpose.msra.mxu0 %v1176
        %1194 = vmatprep.subr.bf16.mxu0 0
        %1195 = vmatpush2.bf16.xpose.msra.mxu0 0
        %1196 = vmatprep.subr.bf16.mxu0 0
        %1197 = vmatpush2.bf16.xpose.msra.mxu0 0
        %1198 = vmatprep.subr.bf16.mxu0 0
        %1199 = vmatpush2.bf16.xpose.msra.mxu0 0
        %1200 = vmatprep.subr.bf16.mxu0 0
        %1201 = vmatpush2.bf16.xpose.msra.mxu0 0
        %1202 = vmatprep.subr.bf16.mxu0 0
        %1203 = vmatpush2.bf16.xpose.msra.mxu0 0
        %1204 = vmatprep.subr.bf16.mxu0 0
        %1205 = vmatpush2.bf16.xpose.msra.mxu0 0
        %1206 = vmatprep.subr.bf16.mxu0 0
        %1207 = vmatpush2.bf16.xpose.msra.mxu0 0
        %1208 = vmatprep.subr.bf16.mxu0 0
        %1209 = vmatpush2.bf16.xpose.msra.mxu0 0
        %1210 = vmatprep.mubr.bf16.mxu0 0
        %1211 = vmatmul.mubr.bf16.gmra.mxu0 %v1173
        %v1212 = vpop.f32.mrf.mxu0
        %v1213 = vadd.f32 0.0, %v1212
        %v1214 = vpop.f32.mrf.mxu0
        %v1215 = vpop.f32.mrf.mxu0
        %v1216 = vpop.f32.mrf.mxu0
        %1217 = vdwg.mxu0
        %v1218 = vsel %vm1046, %v1213, -inf
        %1219 = vmax.xlane.f32.xlu0 %v1218
        %v1220 = vpop.xlane.xlu0 %1219
        %v1221 = vsub.f32 %v1213, %v1220
        %v1222 = vmul.f32 %v1221, 1.442695
        %v1223 = vpow.pop %v1222
        %v1224 = vsel %vm1046, %v1223, 0.0
        %1225 = vadd.xlane.f32.xlu0 %v1224
        %v1226 = vpop.xlane.xlu0 %1225
        %v1227 = vrcp.pop %v1226
        %v1228 = vmul.f32 %v1223, %v1227
        %v1229 = vpack.c.bf16 %v1228, %v1228
        %v1232 = vunpack.c.l.b16 %v1162
        %v1233 = vunpack.c.l.b16 %v1163
        %v1234 = vpack.c.b16 %v1233, %v1232
        %v1237 = vsel %vm1046, %v1229, 0
        %1239 = vmatprep.subr.bf16.mxu0 0
        %1240 = vmatpush1.bf16.msra.mxu0 0
        %1241 = vmatprep.subr.bf16.mxu0 0
        %1242 = vmatpush1.bf16.msra.mxu0 0
        %1243 = vmatprep.subr.bf16.mxu0 0
        %1244 = vmatpush1.bf16.msra.mxu0 0
        %1245 = vmatprep.subr.bf16.mxu0 0
        %1246 = vmatpush1.bf16.msra.mxu0 0
        %1247 = vmatprep.subr.bf16.mxu0 0
        %1248 = vmatpush1.bf16.msra.mxu0 0
        %1249 = vmatprep.subr.bf16.mxu0 0
        %1250 = vmatpush1.bf16.msra.mxu0 0
        %1251 = vmatprep.subr.bf16.mxu0 0
        %1252 = vmatpush1.bf16.msra.mxu0 0
        %1253 = vmatprep.subr.bf16.mxu0 0
        %1254 = vmatpush1.bf16.msra.mxu0 %v1234
        %1255 = vmatprep.subr.bf16.mxu0 0
        %1256 = vmatpush2.bf16.msra.mxu0 0
        %1257 = vmatprep.subr.bf16.mxu0 0
        %1258 = vmatpush2.bf16.msra.mxu0 0
        %1259 = vmatprep.subr.bf16.mxu0 0
        %1260 = vmatpush2.bf16.msra.mxu0 0
        %1261 = vmatprep.subr.bf16.mxu0 0
        %1262 = vmatpush2.bf16.msra.mxu0 0
        %1263 = vmatprep.subr.bf16.mxu0 0
        %1264 = vmatpush2.bf16.msra.mxu0 0
        %1265 = vmatprep.subr.bf16.mxu0 0
        %1266 = vmatpush2.bf16.msra.mxu0 0
        %1267 = vmatprep.subr.bf16.mxu0 0
        %1268 = vmatpush2.bf16.msra.mxu0 0
        %1269 = vmatprep.subr.bf16.mxu0 0
        %1270 = vmatpush2.bf16.msra.mxu0 0
        %1271 = vmatprep.mubr.bf16.mxu0 0
        %1272 = vmatmul.mubr.bf16.gmra.mxu0 %v1237
        %v1273 = vpop.f32.mrf.mxu0
        %v1274 = vadd.f32 0.0, %v1273
        %v1275 = vpop.f32.mrf.mxu0
        %v1276 = vpop.f32.mrf.mxu0
        %v1277 = vpop.f32.mrf.mxu0
        %1278 = vdwg.mxu0
        %v1279 = vpack.c.bf16 %v1274, %v1274
        %v1280 = vld [vmem:[#allocation10 + $0x4] sm:$0xf]
        %v1282 = vsel %vm999, %v1279, 0
        %v1285 = vsel %vm1113, %v1280, 0
        %1287 = vmatprep.subr.bf16.mxu0 0
        %1288 = vmatpush1.bf16.msra.mxu0 0
        %1289 = vmatprep.subr.bf16.mxu0 0
        %1290 = vmatpush1.bf16.msra.mxu0 0
        %1291 = vmatprep.subr.bf16.mxu0 0
        %1292 = vmatpush1.bf16.msra.mxu0 0
        %1293 = vmatprep.subr.bf16.mxu0 0
        %1294 = vmatpush1.bf16.msra.mxu0 0
        %1295 = vmatprep.subr.bf16.mxu0 0
        %1296 = vmatpush1.bf16.msra.mxu0 0
        %1297 = vmatprep.subr.bf16.mxu0 0
        %1298 = vmatpush1.bf16.msra.mxu0 0
        %1299 = vmatprep.subr.bf16.mxu0 0
        %1300 = vmatpush1.bf16.msra.mxu0 0
        %1301 = vmatprep.subr.bf16.mxu0 0
        %1302 = vmatpush1.bf16.msra.mxu0 %v1285
        %1303 = vmatprep.subr.bf16.mxu0 0
        %1304 = vmatpush2.bf16.msra.mxu0 0
        %1305 = vmatprep.subr.bf16.mxu0 0
        %1306 = vmatpush2.bf16.msra.mxu0 0
        %1307 = vmatprep.subr.bf16.mxu0 0
        %1308 = vmatpush2.bf16.msra.mxu0 0
        %1309 = vmatprep.subr.bf16.mxu0 0
        %1310 = vmatpush2.bf16.msra.mxu0 0
        %1311 = vmatprep.subr.bf16.mxu0 0
        %1312 = vmatpush2.bf16.msra.mxu0 0
        %1313 = vmatprep.subr.bf16.mxu0 0
        %1314 = vmatpush2.bf16.msra.mxu0 0
        %1315 = vmatprep.subr.bf16.mxu0 0
        %1316 = vmatpush2.bf16.msra.mxu0 0
        %1317 = vmatprep.subr.bf16.mxu0 0
        %1318 = vmatpush2.bf16.msra.mxu0 0
        %1319 = vmatprep.mubr.bf16.mxu0 0
        %1320 = vmatmul.mubr.bf16.gmra.mxu0 %v1282
        %v1321 = vpop.f32.mrf.mxu0
        %v1322 = vadd.f32 0.0, %v1321
        %v1323 = vpop.f32.mrf.mxu0
        %v1324 = vpop.f32.mrf.mxu0
        %v1325 = vpop.f32.mrf.mxu0
        %1326 = vdwg.mxu0
        %v1327 = vadd.f32 %v1157, %v1322
        %s1328 = scalar_lea.vmem [#allocation2], 16
        %v1329 = vld [vmem:[%s1328] sm:$0xf]
        %v1330 = vld [vmem:[%s1328 + $0x4] sm:$0xf]
        %s1331 = scalar_lea.vmem [#allocation3], 16
        %v1332 = vld [vmem:[%s1331] sm:$0xf]
        %v1333 = vld [vmem:[%s1331 + $0x4] sm:$0xf]
        %1334 = vrot.lane.b32.xlu0 %v989, 112
        %v1335 = vpop.permute.xlu0 %1334
        %v1338 = vunpack.c.l.b16 %v1329
        %v1339 = vunpack.c.l.b16 %v1330
        %v1340 = vpack.c.b16 %v1339, %v1338
        %v1342 = vsel %vm999, %v1335, 0
        %v1345 = vsel %vm999, %v1340, 0
        %1347 = vmatprep.subr.bf16.mxu0 0
        %1348 = vmatpush1.bf16.xpose.msra.mxu0 0
        %1349 = vmatprep.subr.bf16.mxu0 0
        %1350 = vmatpush1.bf16.xpose.msra.mxu0 0
        %1351 = vmatprep.subr.bf16.mxu0 0
        %1352 = vmatpush1.bf16.xpose.msra.mxu0 0
        %1353 = vmatprep.subr.bf16.mxu0 0
        %1354 = vmatpush1.bf16.xpose.msra.mxu0 0
        %1355 = vmatprep.subr.bf16.mxu0 0
        %1356 = vmatpush1.bf16.xpose.msra.mxu0 0
        %1357 = vmatprep.subr.bf16.mxu0 0
        %1358 = vmatpush1.bf16.xpose.msra.mxu0 0
        %1359 = vmatprep.subr.bf16.mxu0 0
        %1360 = vmatpush1.bf16.xpose.msra.mxu0 0
        %1361 = vmatprep.subr.bf16.mxu0 0
        %1362 = vmatpush1.bf16.xpose.msra.mxu0 %v1345
        %1363 = vmatprep.subr.bf16.mxu0 0
        %1364 = vmatpush2.bf16.xpose.msra.mxu0 0
        %1365 = vmatprep.subr.bf16.mxu0 0
        %1366 = vmatpush2.bf16.xpose.msra.mxu0 0
        %1367 = vmatprep.subr.bf16.mxu0 0
        %1368 = vmatpush2.bf16.xpose.msra.mxu0 0
        %1369 = vmatprep.subr.bf16.mxu0 0
        %1370 = vmatpush2.bf16.xpose.msra.mxu0 0
        %1371 = vmatprep.subr.bf16.mxu0 0
        %1372 = vmatpush2.bf16.xpose.msra.mxu0 0
        %1373 = vmatprep.subr.bf16.mxu0 0
        %1374 = vmatpush2.bf16.xpose.msra.mxu0 0
        %1375 = vmatprep.subr.bf16.mxu0 0
        %1376 = vmatpush2.bf16.xpose.msra.mxu0 0
        %1377 = vmatprep.subr.bf16.mxu0 0
        %1378 = vmatpush2.bf16.xpose.msra.mxu0 0
        %1379 = vmatprep.mubr.bf16.mxu0 0
        %1380 = vmatmul.mubr.bf16.gmra.mxu0 %v1342
        %v1381 = vpop.f32.mrf.mxu0
        %v1382 = vadd.f32 0.0, %v1381
        %v1383 = vpop.f32.mrf.mxu0
        %v1384 = vpop.f32.mrf.mxu0
        %v1385 = vpop.f32.mrf.mxu0
        %1386 = vdwg.mxu0
        %v1387 = vsel %vm1046, %v1382, -inf
        %1388 = vmax.xlane.f32.xlu0 %v1387
        %v1389 = vpop.xlane.xlu0 %1388
        %v1390 = vsub.f32 %v1382, %v1389
        %v1391 = vmul.f32 %v1390, 1.442695
        %v1392 = vpow.pop %v1391
        %v1393 = vsel %vm1046, %v1392, 0.0
        %1394 = vadd.xlane.f32.xlu0 %v1393
        %v1395 = vpop.xlane.xlu0 %1394
        %v1396 = vrcp.pop %v1395
        %v1397 = vmul.f32 %v1392, %v1396
        %v1398 = vpack.c.bf16 %v1397, %v1397
        %v1401 = vunpack.c.l.b16 %v1332
        %v1402 = vunpack.c.l.b16 %v1333
        %v1403 = vpack.c.b16 %v1402, %v1401
        %v1406 = vsel %vm1046, %v1398, 0
        %1408 = vmatprep.subr.bf16.mxu0 0
        %1409 = vmatpush1.bf16.msra.mxu0 0
        %1410 = vmatprep.subr.bf16.mxu0 0
        %1411 = vmatpush1.bf16.msra.mxu0 0
        %1412 = vmatprep.subr.bf16.mxu0 0
        %1413 = vmatpush1.bf16.msra.mxu0 0
        %1414 = vmatprep.subr.bf16.mxu0 0
        %1415 = vmatpush1.bf16.msra.mxu0 0
        %1416 = vmatprep.subr.bf16.mxu0 0
        %1417 = vmatpush1.bf16.msra.mxu0 0
        %1418 = vmatprep.subr.bf16.mxu0 0
        %1419 = vmatpush1.bf16.msra.mxu0 0
        %1420 = vmatprep.subr.bf16.mxu0 0
        %1421 = vmatpush1.bf16.msra.mxu0 0
        %1422 = vmatprep.subr.bf16.mxu0 0
        %1423 = vmatpush1.bf16.msra.mxu0 %v1403
        %1424 = vmatprep.subr.bf16.mxu0 0
        %1425 = vmatpush2.bf16.msra.mxu0 0
        %1426 = vmatprep.subr.bf16.mxu0 0
        %1427 = vmatpush2.bf16.msra.mxu0 0
        %1428 = vmatprep.subr.bf16.mxu0 0
        %1429 = vmatpush2.bf16.msra.mxu0 0
        %1430 = vmatprep.subr.bf16.mxu0 0
        %1431 = vmatpush2.bf16.msra.mxu0 0
        %1432 = vmatprep.subr.bf16.mxu0 0
        %1433 = vmatpush2.bf16.msra.mxu0 0
        %1434 = vmatprep.subr.bf16.mxu0 0
        %1435 = vmatpush2.bf16.msra.mxu0 0
        %1436 = vmatprep.subr.bf16.mxu0 0
        %1437 = vmatpush2.bf16.msra.mxu0 0
        %1438 = vmatprep.subr.bf16.mxu0 0
        %1439 = vmatpush2.bf16.msra.mxu0 0
        %1440 = vmatprep.mubr.bf16.mxu0 0
        %1441 = vmatmul.mubr.bf16.gmra.mxu0 %v1406
        %v1442 = vpop.f32.mrf.mxu0
        %v1443 = vadd.f32 0.0, %v1442
        %v1444 = vpop.f32.mrf.mxu0
        %v1445 = vpop.f32.mrf.mxu0
        %v1446 = vpop.f32.mrf.mxu0
        %1447 = vdwg.mxu0
        %v1448 = vpack.c.bf16 %v1443, %v1443
        %v1449 = vld [vmem:[#allocation10 + $0x8] sm:$0xf]
        %v1451 = vsel %vm999, %v1448, 0
        %v1454 = vsel %vm1113, %v1449, 0
        %1456 = vmatprep.subr.bf16.mxu0 0
        %1457 = vmatpush1.bf16.msra.mxu0 0
        %1458 = vmatprep.subr.bf16.mxu0 0
        %1459 = vmatpush1.bf16.msra.mxu0 0
        %1460 = vmatprep.subr.bf16.mxu0 0
        %1461 = vmatpush1.bf16.msra.mxu0 0
        %1462 = vmatprep.subr.bf16.mxu0 0
        %1463 = vmatpush1.bf16.msra.mxu0 0
        %1464 = vmatprep.subr.bf16.mxu0 0
        %1465 = vmatpush1.bf16.msra.mxu0 0
        %1466 = vmatprep.subr.bf16.mxu0 0
        %1467 = vmatpush1.bf16.msra.mxu0 0
        %1468 = vmatprep.subr.bf16.mxu0 0
        %1469 = vmatpush1.bf16.msra.mxu0 0
        %1470 = vmatprep.subr.bf16.mxu0 0
        %1471 = vmatpush1.bf16.msra.mxu0 %v1454
        %1472 = vmatprep.subr.bf16.mxu0 0
        %1473 = vmatpush2.bf16.msra.mxu0 0
        %1474 = vmatprep.subr.bf16.mxu0 0
        %1475 = vmatpush2.bf16.msra.mxu0 0
        %1476 = vmatprep.subr.bf16.mxu0 0
        %1477 = vmatpush2.bf16.msra.mxu0 0
        %1478 = vmatprep.subr.bf16.mxu0 0
        %1479 = vmatpush2.bf16.msra.mxu0 0
        %1480 = vmatprep.subr.bf16.mxu0 0
        %1481 = vmatpush2.bf16.msra.mxu0 0
        %1482 = vmatprep.subr.bf16.mxu0 0
        %1483 = vmatpush2.bf16.msra.mxu0 0
        %1484 = vmatprep.subr.bf16.mxu0 0
        %1485 = vmatpush2.bf16.msra.mxu0 0
        %1486 = vmatprep.subr.bf16.mxu0 0
        %1487 = vmatpush2.bf16.msra.mxu0 0
        %1488 = vmatprep.mubr.bf16.mxu0 0
        %1489 = vmatmul.mubr.bf16.gmra.mxu0 %v1451
        %v1490 = vpop.f32.mrf.mxu0
        %v1491 = vadd.f32 0.0, %v1490
        %v1492 = vpop.f32.mrf.mxu0
        %v1493 = vpop.f32.mrf.mxu0
        %v1494 = vpop.f32.mrf.mxu0
        %1495 = vdwg.mxu0
        %v1496 = vadd.f32 %v1327, %v1491
        %s1497 = scalar_lea.vmem [#allocation2], 24
        %v1498 = vld [vmem:[%s1497] sm:$0xf]
        %v1499 = vld [vmem:[%s1497 + $0x4] sm:$0xf]
        %s1500 = scalar_lea.vmem [#allocation3], 24
        %v1501 = vld [vmem:[%s1500] sm:$0xf]
        %v1502 = vld [vmem:[%s1500 + $0x4] sm:$0xf]
        %1503 = vrot.lane.b32.xlu0 %v989, 104
        %v1504 = vpop.permute.xlu0 %1503
        %v1507 = vunpack.c.l.b16 %v1498
        %v1508 = vunpack.c.l.b16 %v1499
        %v1509 = vpack.c.b16 %v1508, %v1507
        %v1511 = vsel %vm999, %v1504, 0
        %v1514 = vsel %vm999, %v1509, 0
        %1516 = vmatprep.subr.bf16.mxu0 0
        %1517 = vmatpush1.bf16.xpose.msra.mxu0 0
        %1518 = vmatprep.subr.bf16.mxu0 0
        %1519 = vmatpush1.bf16.xpose.msra.mxu0 0
        %1520 = vmatprep.subr.bf16.mxu0 0
        %1521 = vmatpush1.bf16.xpose.msra.mxu0 0
        %1522 = vmatprep.subr.bf16.mxu0 0
        %1523 = vmatpush1.bf16.xpose.msra.mxu0 0
        %1524 = vmatprep.subr.bf16.mxu0 0
        %1525 = vmatpush1.bf16.xpose.msra.mxu0 0
        %1526 = vmatprep.subr.bf16.mxu0 0
        %1527 = vmatpush1.bf16.xpose.msra.mxu0 0
        %1528 = vmatprep.subr.bf16.mxu0 0
        %1529 = vmatpush1.bf16.xpose.msra.mxu0 0
        %1530 = vmatprep.subr.bf16.mxu0 0
        %1531 = vmatpush1.bf16.xpose.msra.mxu0 %v1514
        %1532 = vmatprep.subr.bf16.mxu0 0
        %1533 = vmatpush2.bf16.xpose.msra.mxu0 0
        %1534 = vmatprep.subr.bf16.mxu0 0
        %1535 = vmatpush2.bf16.xpose.msra.mxu0 0
        %1536 = vmatprep.subr.bf16.mxu0 0
        %1537 = vmatpush2.bf16.xpose.msra.mxu0 0
        %1538 = vmatprep.subr.bf16.mxu0 0
        %1539 = vmatpush2.bf16.xpose.msra.mxu0 0
        %1540 = vmatprep.subr.bf16.mxu0 0
        %1541 = vmatpush2.bf16.xpose.msra.mxu0 0
        %1542 = vmatprep.subr.bf16.mxu0 0
        %1543 = vmatpush2.bf16.xpose.msra.mxu0 0
        %1544 = vmatprep.subr.bf16.mxu0 0
        %1545 = vmatpush2.bf16.xpose.msra.mxu0 0
        %1546 = vmatprep.subr.bf16.mxu0 0
        %1547 = vmatpush2.bf16.xpose.msra.mxu0 0
        %1548 = vmatprep.mubr.bf16.mxu0 0
        %1549 = vmatmul.mubr.bf16.gmra.mxu0 %v1511
        %v1550 = vpop.f32.mrf.mxu0
        %v1551 = vadd.f32 0.0, %v1550
        %v1552 = vpop.f32.mrf.mxu0
        %v1553 = vpop.f32.mrf.mxu0
        %v1554 = vpop.f32.mrf.mxu0
        %1555 = vdwg.mxu0
        %v1556 = vsel %vm1046, %v1551, -inf
        %1557 = vmax.xlane.f32.xlu0 %v1556
        %v1558 = vpop.xlane.xlu0 %1557
        %v1559 = vsub.f32 %v1551, %v1558
        %v1560 = vmul.f32 %v1559, 1.442695
        %v1561 = vpow.pop %v1560
        %v1562 = vsel %vm1046, %v1561, 0.0
        %1563 = vadd.xlane.f32.xlu0 %v1562
        %v1564 = vpop.xlane.xlu0 %1563
        %v1565 = vrcp.pop %v1564
        %v1566 = vmul.f32 %v1561, %v1565
        %v1567 = vpack.c.bf16 %v1566, %v1566
        %v1570 = vunpack.c.l.b16 %v1501
        %v1571 = vunpack.c.l.b16 %v1502
        %v1572 = vpack.c.b16 %v1571, %v1570
        %v1575 = vsel %vm1046, %v1567, 0
        %1577 = vmatprep.subr.bf16.mxu0 0
        %1578 = vmatpush1.bf16.msra.mxu0 0
        %1579 = vmatprep.subr.bf16.mxu0 0
        %1580 = vmatpush1.bf16.msra.mxu0 0
        %1581 = vmatprep.subr.bf16.mxu0 0
        %1582 = vmatpush1.bf16.msra.mxu0 0
        %1583 = vmatprep.subr.bf16.mxu0 0
        %1584 = vmatpush1.bf16.msra.mxu0 0
        %1585 = vmatprep.subr.bf16.mxu0 0
        %1586 = vmatpush1.bf16.msra.mxu0 0
        %1587 = vmatprep.subr.bf16.mxu0 0
        %1588 = vmatpush1.bf16.msra.mxu0 0
        %1589 = vmatprep.subr.bf16.mxu0 0
        %1590 = vmatpush1.bf16.msra.mxu0 0
        %1591 = vmatprep.subr.bf16.mxu0 0
        %1592 = vmatpush1.bf16.msra.mxu0 %v1572
        %1593 = vmatprep.subr.bf16.mxu0 0
        %1594 = vmatpush2.bf16.msra.mxu0 0
        %1595 = vmatprep.subr.bf16.mxu0 0
        %1596 = vmatpush2.bf16.msra.mxu0 0
        %1597 = vmatprep.subr.bf16.mxu0 0
        %1598 = vmatpush2.bf16.msra.mxu0 0
        %1599 = vmatprep.subr.bf16.mxu0 0
        %1600 = vmatpush2.bf16.msra.mxu0 0
        %1601 = vmatprep.subr.bf16.mxu0 0
        %1602 = vmatpush2.bf16.msra.mxu0 0
        %1603 = vmatprep.subr.bf16.mxu0 0
        %1604 = vmatpush2.bf16.msra.mxu0 0
        %1605 = vmatprep.subr.bf16.mxu0 0
        %1606 = vmatpush2.bf16.msra.mxu0 0
        %1607 = vmatprep.subr.bf16.mxu0 0
        %1608 = vmatpush2.bf16.msra.mxu0 0
        %1609 = vmatprep.mubr.bf16.mxu0 0
        %1610 = vmatmul.mubr.bf16.gmra.mxu0 %v1575
        %v1611 = vpop.f32.mrf.mxu0
        %v1612 = vadd.f32 0.0, %v1611
        %v1613 = vpop.f32.mrf.mxu0
        %v1614 = vpop.f32.mrf.mxu0
        %v1615 = vpop.f32.mrf.mxu0
        %1616 = vdwg.mxu0
        %v1617 = vpack.c.bf16 %v1612, %v1612
        %v1618 = vld [vmem:[#allocation10 + $0xc] sm:$0xf]
        %v1620 = vsel %vm999, %v1617, 0
        %v1623 = vsel %vm1113, %v1618, 0
        %1625 = vmatprep.subr.bf16.mxu0 0
        %1626 = vmatpush1.bf16.msra.mxu0 0
        %1627 = vmatprep.subr.bf16.mxu0 0
        %1628 = vmatpush1.bf16.msra.mxu0 0
        %1629 = vmatprep.subr.bf16.mxu0 0
        %1630 = vmatpush1.bf16.msra.mxu0 0
        %1631 = vmatprep.subr.bf16.mxu0 0
        %1632 = vmatpush1.bf16.msra.mxu0 0
        %1633 = vmatprep.subr.bf16.mxu0 0
        %1634 = vmatpush1.bf16.msra.mxu0 0
        %1635 = vmatprep.subr.bf16.mxu0 0
        %1636 = vmatpush1.bf16.msra.mxu0 0
        %1637 = vmatprep.subr.bf16.mxu0 0
        %1638 = vmatpush1.bf16.msra.mxu0 0
        %1639 = vmatprep.subr.bf16.mxu0 0
        %1640 = vmatpush1.bf16.msra.mxu0 %v1623
        %1641 = vmatprep.subr.bf16.mxu0 0
        %1642 = vmatpush2.bf16.msra.mxu0 0
        %1643 = vmatprep.subr.bf16.mxu0 0
        %1644 = vmatpush2.bf16.msra.mxu0 0
        %1645 = vmatprep.subr.bf16.mxu0 0
        %1646 = vmatpush2.bf16.msra.mxu0 0
        %1647 = vmatprep.subr.bf16.mxu0 0
        %1648 = vmatpush2.bf16.msra.mxu0 0
        %1649 = vmatprep.subr.bf16.mxu0 0
        %1650 = vmatpush2.bf16.msra.mxu0 0
        %1651 = vmatprep.subr.bf16.mxu0 0
        %1652 = vmatpush2.bf16.msra.mxu0 0
        %1653 = vmatprep.subr.bf16.mxu0 0
        %1654 = vmatpush2.bf16.msra.mxu0 0
        %1655 = vmatprep.subr.bf16.mxu0 0
        %1656 = vmatpush2.bf16.msra.mxu0 0
        %1657 = vmatprep.mubr.bf16.mxu0 0
        %1658 = vmatmul.mubr.bf16.gmra.mxu0 %v1620
        %v1659 = vpop.f32.mrf.mxu0
        %v1660 = vadd.f32 0.0, %v1659
        %v1661 = vpop.f32.mrf.mxu0
        %v1662 = vpop.f32.mrf.mxu0
        %v1663 = vpop.f32.mrf.mxu0
        %1664 = vdwg.mxu0
        %v1665 = vadd.f32 %v1496, %v1660
        %v1666 = vadd.f32 %v1665, %v911
        %v1667 = vld [vmem:[%s10] sm:$0x1]
        %v1668 = vld [vmem:[%s11] sm:$0x1]
        %v1669 = vsel %vm936, %v1666, 0.0
        %1670 = vadd.xlane.f32.xlu0 %v1669
        %v1671 = vpop.xlane.xlu0 %1670
        %v1672 = vrcp.pop 32.0
        %v1673 = vmul.f32 %v1671, %v1672
        %v1674 = vsub.f32 %v1666, %v1673
        %v1675 = vmul.f32 %v1674, %v1674
        %v1676 = vsel %vm936, %v1675, 0.0
        %1677 = vadd.xlane.f32.xlu0 %v1676
        %v1678 = vpop.xlane.xlu0 %1677
        %v1679 = vmul.f32 %v1678, %v1672
        %v1680 = vadd.f32 %v1679, 1e-12
        %v1681 = vrsqrt.pop %v1680
        %v1682 = vmul.f32 %v1674, %v1681
        %v1684 = vlaneseq
        %v1685 = vshrl.u32 %v1684, 7
        %v1686 = vsub.s32 0, %v1685
        %v1687 = vrot.slane %v1667, %v1686
        %v1689 = vmul.f32 %v1682, %v1687
        %v1691 = vlaneseq
        %v1692 = vshrl.u32 %v1691, 7
        %v1693 = vsub.s32 0, %v1692
        %v1694 = vrot.slane %v1668, %v1693
        %v1696 = vadd.f32 %v1689, %v1694
        %v1697 = vpack.c.bf16 %v1696, %v1696
        %v1698 = vld [vmem:[%s15] sm:$0x1]
        %v1700 = vlaneseq
        %v1701 = vshrl.u32 %v1700, 7
        %v1702 = vsub.s32 0, %v1701
        %v1703 = vrot.slane %v1698, %v1702
        %v1705 = vadd.f32 %v1703, 0.0
        %v1706 = vld [vmem:[#allocation12] sm:$0xf]
        %v1707 = vld [vmem:[#allocation12 + $0x4] sm:$0xf]
        %v1708 = vld [vmem:[#allocation12 + $0x8] sm:$0xf]
        %v1709 = vld [vmem:[#allocation12 + $0xc] sm:$0xf]
        %v1710 = vld [vmem:[%s13] sm:$0x1]
        %v1712 = vlaneseq
        %v1713 = vshrl.u32 %v1712, 7
        %v1714 = vsub.s32 0, %v1713
        %v1715 = vrot.slane %v1710, %v1714
        %v1721 = vunpack.c.l.b16 %v1706
        %v1722 = vunpack.c.l.b16 %v1707
        %v1723 = vunpack.c.l.b16 %v1708
        %v1724 = vunpack.c.l.b16 %v1709
        %v1725 = vpack.c.b16 %v1722, %v1721
        %v1726 = vpack.c.b16 %v1724, %v1723
        %v1730 = vsel %vm936, %v1697, 0
        %1732 = vmatprep.subr.bf16.mxu0 0
        %1733 = vmatpush1.bf16.msra.mxu0 0
        %1734 = vmatprep.subr.bf16.mxu0 0
        %1735 = vmatpush1.bf16.msra.mxu0 0
        %1736 = vmatprep.subr.bf16.mxu0 0
        %1737 = vmatpush1.bf16.msra.mxu0 0
        %1738 = vmatprep.subr.bf16.mxu0 0
        %1739 = vmatpush1.bf16.msra.mxu0 0
        %1740 = vmatprep.subr.bf16.mxu0 0
        %1741 = vmatpush1.bf16.msra.mxu0 0
        %1742 = vmatprep.subr.bf16.mxu0 0
        %1743 = vmatpush1.bf16.msra.mxu0 0
        %1744 = vmatprep.subr.bf16.mxu0 0
        %1745 = vmatpush1.bf16.msra.mxu0 %v1726
        %1746 = vmatprep.subr.bf16.mxu0 0
        %1747 = vmatpush1.bf16.msra.mxu0 %v1725
        %1748 = vmatprep.subr.bf16.mxu0 0
        %1749 = vmatpush2.bf16.msra.mxu0 0
        %1750 = vmatprep.subr.bf16.mxu0 0
        %1751 = vmatpush2.bf16.msra.mxu0 0
        %1752 = vmatprep.subr.bf16.mxu0 0
        %1753 = vmatpush2.bf16.msra.mxu0 0
        %1754 = vmatprep.subr.bf16.mxu0 0
        %1755 = vmatpush2.bf16.msra.mxu0 0
        %1756 = vmatprep.subr.bf16.mxu0 0
        %1757 = vmatpush2.bf16.msra.mxu0 0
        %1758 = vmatprep.subr.bf16.mxu0 0
        %1759 = vmatpush2.bf16.msra.mxu0 0
        %1760 = vmatprep.subr.bf16.mxu0 0
        %1761 = vmatpush2.bf16.msra.mxu0 0
        %1762 = vmatprep.subr.bf16.mxu0 0
        %1763 = vmatpush2.bf16.msra.mxu0 0
        %1764 = vmatprep.mubr.bf16.mxu0 0
        %1765 = vmatmul.mubr.bf16.gmra.mxu0 %v1730
        %v1766 = vpop.f32.mrf.mxu0
        %v1767 = vadd.f32 %v1715, %v1766
        %v1768 = vpop.f32.mrf.mxu0
        %v1769 = vpop.f32.mrf.mxu0
        %v1770 = vpop.f32.mrf.mxu0
        %1771 = vdwg.mxu0
        %v1772 = vmul.f32 %v1767, 0.5
        %v1773 = vmul.f32 %v1767, 0.70710677
        %v1774 = verf.f32.pop %v1773
        %v1775 = vadd.f32 %v1774, 1.0
        %v1776 = vmul.f32 %v1772, %v1775
        %v1777 = vpack.c.bf16 %v1776, %v1776
        %v1778 = vld [vmem:[%s14] sm:$0xf]
        %v1779 = vld [vmem:[%s14 + $0x4] sm:$0xf]
        %v1780 = vld [vmem:[%s14 + $0x8] sm:$0xf]
        %v1781 = vld [vmem:[%s14 + $0xc] sm:$0xf]
        %v1782 = vld [vmem:[%s14 + $0x10] sm:$0xf]
        %v1783 = vld [vmem:[%s14 + $0x14] sm:$0xf]
        %v1784 = vld [vmem:[%s14 + $0x18] sm:$0xf]
        %v1785 = vld [vmem:[%s14 + $0x1c] sm:$0xf]
        %v1794 = vunpack.c.l.b16 %v1778
        %v1795 = vunpack.c.l.b16 %v1779
        %v1796 = vunpack.c.l.b16 %v1780
        %v1797 = vunpack.c.l.b16 %v1781
        %v1798 = vunpack.c.l.b16 %v1782
        %v1799 = vunpack.c.l.b16 %v1783
        %v1800 = vunpack.c.l.b16 %v1784
        %v1801 = vunpack.c.l.b16 %v1785
        %v1802 = vpack.c.b16 %v1795, %v1794
        %v1803 = vpack.c.b16 %v1797, %v1796
        %v1804 = vpack.c.b16 %v1799, %v1798
        %v1805 = vpack.c.b16 %v1801, %v1800
        %vm1810 = vcmask 523264
        %v1812 = vsel %vm1810, %v1777, 0
        %1814 = vmatprep.subr.bf16.mxu0 0
        %1815 = vmatpush1.bf16.msra.mxu0 0
        %1816 = vmatprep.subr.bf16.mxu0 0
        %1817 = vmatpush1.bf16.msra.mxu0 0
        %1818 = vmatprep.subr.bf16.mxu0 0
        %1819 = vmatpush1.bf16.msra.mxu0 0
        %1820 = vmatprep.subr.bf16.mxu0 0
        %1821 = vmatpush1.bf16.msra.mxu0 0
        %1822 = vmatprep.subr.bf16.mxu0 0
        %1823 = vmatpush1.bf16.msra.mxu0 %v1805
        %1824 = vmatprep.subr.bf16.mxu0 0
        %1825 = vmatpush1.bf16.msra.mxu0 %v1804
        %1826 = vmatprep.subr.bf16.mxu0 0
        %1827 = vmatpush1.bf16.msra.mxu0 %v1803
        %1828 = vmatprep.subr.bf16.mxu0 0
        %1829 = vmatpush1.bf16.msra.mxu0 %v1802
        %1830 = vmatprep.subr.bf16.mxu0 0
        %1831 = vmatpush2.bf16.msra.mxu0 0
        %1832 = vmatprep.subr.bf16.mxu0 0
        %1833 = vmatpush2.bf16.msra.mxu0 0
        %1834 = vmatprep.subr.bf16.mxu0 0
        %1835 = vmatpush2.bf16.msra.mxu0 0
        %1836 = vmatprep.subr.bf16.mxu0 0
        %1837 = vmatpush2.bf16.msra.mxu0 0
        %1838 = vmatprep.subr.bf16.mxu0 0
        %1839 = vmatpush2.bf16.msra.mxu0 0
        %1840 = vmatprep.subr.bf16.mxu0 0
        %1841 = vmatpush2.bf16.msra.mxu0 0
        %1842 = vmatprep.subr.bf16.mxu0 0
        %1843 = vmatpush2.bf16.msra.mxu0 0
        %1844 = vmatprep.subr.bf16.mxu0 0
        %1845 = vmatpush2.bf16.msra.mxu0 0
        %1846 = vmatprep.mubr.bf16.mxu0 0
        %1847 = vmatmul.mubr.bf16.gmra.mxu0 %v1812
        %v1848 = vpop.f32.mrf.mxu0
        %v1849 = vadd.f32 0.0, %v1848
        %v1850 = vpop.f32.mrf.mxu0
        %v1851 = vpop.f32.mrf.mxu0
        %v1852 = vpop.f32.mrf.mxu0
        %1853 = vdwg.mxu0
        %v1854 = vadd.f32 %v1705, %v1849
        %v1855 = vadd.f32 %v1854, %v1696
        %v1856 = vld [vmem:[%s16] sm:$0x1]
        %v1857 = vld [vmem:[%s17] sm:$0x1]
        %v1858 = vsel %vm936, %v1855, 0.0
        %1859 = vadd.xlane.f32.xlu0 %v1858
        %v1860 = vpop.xlane.xlu0 %1859
        %v1861 = vmul.f32 %v1860, %v1672
        %v1862 = vsub.f32 %v1855, %v1861
        %v1863 = vmul.f32 %v1862, %v1862
        %v1864 = vsel %vm936, %v1863, 0.0
        %1865 = vadd.xlane.f32.xlu0 %v1864
        %v1866 = vpop.xlane.xlu0 %1865
        %v1867 = vmul.f32 %v1866, %v1672
        %v1868 = vadd.f32 %v1867, 1e-12
        %v1869 = vrsqrt.pop %v1868
        %v1870 = vmul.f32 %v1862, %v1869
        %v1872 = vlaneseq
        %v1873 = vshrl.u32 %v1872, 7
        %v1874 = vsub.s32 0, %v1873
        %v1875 = vrot.slane %v1856, %v1874
        %v1877 = vmul.f32 %v1870, %v1875
        %v1879 = vlaneseq
        %v1880 = vshrl.u32 %v1879, 7
        %v1881 = vsub.s32 0, %v1880
        %v1882 = vrot.slane %v1857, %v1881
        %v1884 = vadd.f32 %v1877, %v1882
        %1885 = vst.msk [vmem:[%s678] sm:$0xff] %vm936, %v1884
        %s1886 = sand.u32 %s447, 1
        %s1887 = scalar_lea.sflag [#allocation6], %s1886
        %s1888 = sand.u32 %s447, 1
        %s1889 = smul.addr %s1888, 8
        %s1890 = scalar_lea.vmem [#allocation13], %s1889
        // Predicated region
        $region117: #{tpu_custom_call.1} parent=91 // pred_check
          %p1891 = pneg %p457
        $region118: #{tpu_custom_call.1} parent=91 // pred_check_branch
          %1893 = sbr.rel (%p1891) target = $region120
        $region119: #{tpu_custom_call.1} parent=91 // pred_region
          %s1895 = ssub.s32 128, 128
          %1896 = vsyncadd %s1887, %s1895
          %s1897 = smul.addr %s39, 2
          %s1898 = sadd.s32 %s40, %s1897
          %s1899 = smul.addr %s1898, 128
          %s1900 = scalar_lea.hbm %s18, %s1899
          %s1902 = sshll.u32 %s1890, 4
          %s1903 = int_to_ptr.vmem [resolvable:$true] %s1902
          %1905 = dma.vmem_to_hbm [thread:$0]  %s1903, 128, %s1900, %s1887
        $region120: #{tpu_custom_call.1} parent=91 // pred_fallthru
          _
      $region92: #{tpu_custom_call.1} parent=5 // pred_fallthru
        _
      %p1906 = scmp.le.s32.totalorder 2, %s30
      // Predicated region
      $region121: #{tpu_custom_call.1} parent=5 // pred_check
        %p1907 = pneg %p1906
      $region122: #{tpu_custom_call.1} parent=5 // pred_check_branch
        %1909 = sbr.rel (%p1907) target = $region124
      $region123: #{tpu_custom_call.1} parent=5 // pred_region
        %s1910 = ssub.s32 %s30, 2
        // Predicated region
        $region125: #{tpu_custom_call.1} parent=123 // pred_check
          %p1911 = pneg %p463
        $region126: #{tpu_custom_call.1} parent=123 // pred_check_branch
          %1913 = sbr.rel (%p1911) target = $region128
        $region127: #{tpu_custom_call.1} parent=123 // pred_region
          %s1914 = sand.u32 %s448, 1
          %s1915 = scalar_lea.sflag [#allocation6], %s1914
          %s1916 = sand.u32 %s448, 1
          %s1917 = smul.addr %s1916, 8
          %s1918 = scalar_lea.vmem [#allocation13], %s1917
          %1919 = dma.done %s1915, 128
        $region128: #{tpu_custom_call.1} parent=123 // pred_fallthru
          _
      $region124: #{tpu_custom_call.1} parent=5 // pred_fallthru
        _
    $region6: #{tpu_custom_call.1} parent=1 // loop_footer
      %s34 = sadd.s32 1, %s30
    $region7: #{tpu_custom_call.1} parent=1 // loop_footer_branch
      %29 = sbr.rel target = $region3
    $region8: #{tpu_custom_call.1} parent=1 // loop_exit
      _
    %1920 = vsyncpa [#allocation5], 1
    %s1921 = scalar_lea.sflag [#allocation5], 1
    %1922 = vsyncpa %s1921, 1
    %1923 = vsyncpa [#allocation8], 1
    %1924 = vsyncpa [#allocation11], 1
    %1925 = vsyncpa [#allocation6], 1
    %s1926 = scalar_lea.sflag [#allocation6], 1
    %1927 = vsyncpa %s1926, 1

</llo_original>
